<compile_context>
chip_gen: v6e
topology: v6e:2x2x1
jax: 0.10.0
libtpu: 0.0.40
codegen_flags: <defaults>
</compile_context>

<pallas_src>
import functools

import jax
import jax.numpy as jnp
import numpy as np
from jax import lax
from jax.experimental import pallas as pl
from jax.experimental.pallas import tpu as pltpu


def _bottleneck_kernel(W, Cw, Cout, prec,
                       x_ref, w1_ref, w2_ref, w3_ref, b_ref, cm_ref, out_ref):
    """One batch image per grid step, channels-first, spatially flattened.

    x_ref  : (Cin, S=H*W)   f32 input image (spatial flattened on lanes)
    w1_ref : (Cw, Cin)      conv1 weight^T, BN1 scale folded
    w2_ref : (3*Cw, 3*Cw)   conv2 weight: rows = dx-stacked co, cols = dy-stacked ci
    w3_ref : (Cout, Cw)     conv3 weight^T, BN3 scale folded
    b_ref  : (2*Cw+Cout, 1) [b1; b2; b3] folded BN biases
    cm_ref : (2, S)         f32 column masks [col >= 1, col <= W-2]
    out_ref: (Cout, S)
    """
    S = x_ref.shape[-1]
    mm = w1_ref.dtype

    # ---- conv1 (1x1, BN1 folded) + bias + relu, cast once to matmul dtype --
    h1 = jnp.dot(w1_ref[...], x_ref[...].astype(mm),
                 preferred_element_type=jnp.float32, precision=prec)  # (Cw, S)
    h1 = jnp.maximum(h1 + b_ref[0:Cw, :], 0.0).astype(mm)

    # ---- conv2 (3x3, stride 1, pad 1) --------------------------------------
    # dy folded into K: roll the image by +/-W lanes (XLU) and zero the
    # wrapped row (== the zero-padding row).  dx recovered on the output side:
    # a single matmul produces the three dx-partials stacked along M, which
    # are lane-shifted by dx and column-masked before summing.
    li = lax.broadcasted_iota(jnp.int32, (1, S), 1)
    up = jnp.where(li >= W, pltpu.roll(h1, W, axis=1), 0.0)          # row y-1
    dn = jnp.where(li < S - W, pltpu.roll(h1, S - W, axis=1), 0.0)   # row y+1
    im2col = jnp.concatenate([up, h1, dn], axis=0)                   # (3*Cw, S)

    q = jnp.dot(w2_ref[...], im2col,
                preferred_element_type=jnp.float32, precision=prec)  # (3*Cw, S)
    h2 = (q[Cw:2 * Cw]                                               # dx =  0
          + pltpu.roll(q[0:Cw], 1, axis=1) * cm_ref[0:1, :]          # dx = -1
          + pltpu.roll(q[2 * Cw:3 * Cw], S - 1, axis=1) * cm_ref[1:2, :])  # dx = +1
    h2 = jnp.maximum(h2 + b_ref[Cw:2 * Cw, :], 0.0).astype(mm)

    # ---- conv3 (1x1) + bias + identity residual + relu ---------------------
    h3 = jnp.dot(w3_ref[...], h2,
                 preferred_element_type=jnp.float32, precision=prec)  # (Cout, S)
    out = jnp.maximum(h3 + b_ref[2 * Cw:2 * Cw + Cout, :] + x_ref[...], 0.0)
    out_ref[...] = out.astype(out_ref.dtype)


def bottleneck_forward(x_nchw, params, *, matmul_dtype=jnp.bfloat16,
                       vmem_limit_bytes=None):
    """Fused Bottleneck forward.  x_nchw: (N, Cin, H, W) float32 (PyTorch layout)."""
    N, Cin, H, W = x_nchw.shape
    S = H * W
    w1, w2, w3 = params['w1'], params['w2'], params['w3']
    Cw = w1.shape[1]
    Cout = w3.shape[1]
    assert Cout == Cin, "identity residual requires Cout == Cin (no downsample)"

    # ---- fold BN (inference) scales into the conv weights -------------------
    s1, b1 = params['s1'].reshape(Cw), params['b1'].reshape(Cw)
    s2, b2 = params['s2'].reshape(Cw), params['b2'].reshape(Cw)
    s3, b3 = params['s3'].reshape(Cout), params['b3'].reshape(Cout)
    w1t = (w1 * s1[None, :]).T.astype(matmul_dtype)                    # (Cw, Cin)
    w2s = w2 * s2[None, None, None, :]                                 # (3,3,Cw,Cw) (dy,dx,ci,co)
    # w2m[dx*Cw + co, dy*Cw + ci] = w2[dy, dx, ci, co] * s2[co]
    w2m = jnp.transpose(w2s, (1, 3, 0, 2)).reshape(3 * Cw, 3 * Cw).astype(matmul_dtype)
    w3t = (w3 * s3[None, :]).T.astype(matmul_dtype)                    # (Cout, Cw)
    b_all = jnp.concatenate([b1, b2, b3]).reshape(2 * Cw + Cout, 1).astype(jnp.float32)

    # Precomputed column masks for the dx = -1 / dx = +1 output shifts.
    col = np.arange(S, dtype=np.int32) % W
    cmask = jnp.asarray(np.stack([(col >= 1), (col <= W - 2)]).astype(np.float32))  # (2, S)

    # ---- per-generation VMEM budget -----------------------------------------
    if vmem_limit_bytes is None:
        try:
            cap = int(pltpu.get_tpu_info().vmem_capacity_bytes)
        except Exception:
            cap = 64 * 1024 * 1024            # conservative (v7x per-TC capacity)
        vmem_limit_bytes = max(32 * 1024 * 1024, int(0.75 * cap))

    itm = jnp.dtype(matmul_dtype).itemsize
    est_per_step = (2 * (Cin + Cout) * S * 4          # double-buffered x / out blocks
                    + (Cin + 10 * Cw) * S * itm       # x cast + h1/up/dn/dy-stack
                    + (5 * Cw + 2 * Cout) * S * 4)    # f32 h1 / q / h2 / h3 temps
    if est_per_step * 3 // 2 > vmem_limit_bytes:
        # TODO(synk): row tiling with halo exchange for feature maps too large
        #             to keep one whole image VMEM-resident.
        raise NotImplementedError("feature map too large for whole-image tiling")

    prec = (lax.Precision.HIGHEST
            if jnp.dtype(matmul_dtype) == jnp.dtype(jnp.float32)
            else lax.Precision.DEFAULT)
    kernel = functools.partial(_bottleneck_kernel, W, Cw, Cout, prec)

    x_body = x_nchw.reshape(N, Cin, S)                 # free reshape, native NCHW

    out_flat = pl.pallas_call(
        kernel,
        out_shape=jax.ShapeDtypeStruct((N, Cout, S), x_nchw.dtype),
        grid_spec=pltpu.PrefetchScalarGridSpec(
            num_scalar_prefetch=0,
            grid=(N,),
            in_specs=[
                pl.BlockSpec((pl.Squeezed(), Cin, S), lambda n: (n, 0, 0)),
                pl.BlockSpec((Cw, Cin), lambda n: (0, 0)),
                pl.BlockSpec((3 * Cw, 3 * Cw), lambda n: (0, 0)),
                pl.BlockSpec((Cout, Cw), lambda n: (0, 0)),
                pl.BlockSpec((2 * Cw + Cout, 1), lambda n: (0, 0)),
                pl.BlockSpec((2, S), lambda n: (0, 0)),
            ],
            out_specs=pl.BlockSpec((pl.Squeezed(), Cout, S), lambda n: (n, 0, 0)),
        ),
        compiler_params=pltpu.CompilerParams(
            dimension_semantics=("parallel",),
            vmem_limit_bytes=int(vmem_limit_bytes)),
    )(x_body, w1t, w2m, w3t, b_all, cmask)

    return out_flat.reshape(N, Cout, H, W)


# ------------------------- pure-JAX reference --------------------------------
def bottleneck_ref(x_nchw, params):
    """Exact (f32) module semantics: conv -> BN(scale/bias) -> relu chain."""
    hp = lax.Precision.HIGHEST
    x = jnp.transpose(x_nchw, (0, 2, 3, 1))                                # NHWC
    h = jnp.einsum('nhwc,cd->nhwd', x, params['w1'], precision=hp)
    h = jnp.maximum(h * params['s1'] + params['b1'], 0.0)
    h = lax.conv_general_dilated(h, params['w2'], (1, 1), ((1, 1), (1, 1)),
                                 dimension_numbers=('NHWC', 'HWIO', 'NHWC'),
                                 precision=hp)
    h = jnp.maximum(h * params['s2'] + params['b2'], 0.0)
    h = jnp.einsum('nhwc,cd->nhwd', h, params['w3'], precision=hp)
    h = h * params['s3'] + params['b3']
    out = jnp.maximum(h + x, 0.0)
    return jnp.transpose(out, (0, 3, 1, 2))


def make_params(key, inplanes, planes, base_width=64, groups=1, eps=1e-5):
    width = int(planes * (base_width / 64.0)) * groups
    cout = planes * 4  # expansion = 4
    ks = jax.random.split(key, 6)

    def bn_fold(k, c):
        kg, kb, km, kv = jax.random.split(k, 4)
        gamma = 1.0 + 0.1 * jax.random.normal(kg, (c,), jnp.float32)
        beta = 0.1 * jax.random.normal(kb, (c,), jnp.float32)
        mean = 0.1 * jax.random.normal(km, (c,), jnp.float32)
        var = jnp.abs(jax.random.normal(kv, (c,), jnp.float32)) + 0.5
        scale = gamma / jnp.sqrt(var + eps)
        bias = beta - mean * scale
        return scale.reshape(1, c), bias.reshape(1, c)

    w1 = 0.1 * jax.random.normal(ks[0], (inplanes, width), jnp.float32)
    w2 = 0.1 * jax.random.normal(ks[1], (3, 3, width, width), jnp.float32)
    w3 = 0.1 * jax.random.normal(ks[2], (width, cout), jnp.float32)
    s1, b1 = bn_fold(ks[3], width)
    s2, b2 = bn_fold(ks[4], width)
    s3, b3 = bn_fold(ks[5], cout)
    return dict(w1=w1, w2=w2, w3=w3, s1=s1, b1=b1, s2=s2, b2=b2, s3=s3, b3=b3)


if __name__ == "__main__":
    key = jax.random.PRNGKey(0)
    k_x, k_p = jax.random.split(key)

    # Bottleneck(inplanes=16, planes=4): width=4, output channels=16 (=Cin).
    N, Cin, H, W = 2, 16, 16, 16
    planes = 4
    x = jax.random.normal(k_x, (N, Cin, H, W), jnp.float32)   # NCHW, like PyTorch
    params = make_params(k_p, Cin, planes)

    ref = jax.block_until_ready(bottleneck_ref(x, params))

    # f32 matmul path: structural / numerical check.
    out_f32 = jax.block_until_ready(
        bottleneck_forward(x, params, matmul_dtype=jnp.float32))
    np.testing.assert_allclose(np.asarray(out_f32), np.asarray(ref),
                               rtol=1e-2, atol=1e-2)

    # bf16 matmul-input path (MXU peak on v6e/v7x); f32 accumulation.
    out_bf16 = jax.block_until_ready(
        bottleneck_forward(x, params, matmul_dtype=jnp.bfloat16))
    np.testing.assert_allclose(np.asarray(out_bf16), np.asarray(ref),
                               rtol=5e-2, atol=5e-2)

    print("KERNEL_OK")
</pallas_src>

<mosaic_0001>
module attributes {stable_mosaic.version = 11 : i64} {
  func.func @_bottleneck_kernel(%arg0: i32, %arg1: memref<1x16x256xf32, #tpu.memory_space<vmem>>, %arg2: memref<4x16xf32, #tpu.memory_space<vmem>>, %arg3: memref<12x12xf32, #tpu.memory_space<vmem>>, %arg4: memref<16x4xf32, #tpu.memory_space<vmem>>, %arg5: memref<24x1xf32, #tpu.memory_space<vmem>>, %arg6: memref<2x256xf32, #tpu.memory_space<vmem>>, %arg7: memref<1x16x256xf32, #tpu.memory_space<vmem>>) attributes {dimension_semantics = [#tpu.dimension_semantics<parallel>], iteration_bounds = array<i64: 2>, scalar_prefetch = 0 : i64, scratch_operands = 0 : i64, tpu.core_type = #tpu.core_type<tc>, window_params = [{transform_indices = @transform_0, window_bounds = array<i64: 1, 16, 256>}, {pipeline_mode = #tpu.pipeline_mode<synchronous>, transform_indices = @transform_1, window_bounds = array<i64: 4, 16>}, {pipeline_mode = #tpu.pipeline_mode<synchronous>, transform_indices = @transform_2, window_bounds = array<i64: 12, 12>}, {pipeline_mode = #tpu.pipeline_mode<synchronous>, transform_indices = @transform_3, window_bounds = array<i64: 16, 4>}, {pipeline_mode = #tpu.pipeline_mode<synchronous>, transform_indices = @transform_4, window_bounds = array<i64: 24, 1>}, {pipeline_mode = #tpu.pipeline_mode<synchronous>, transform_indices = @transform_5, window_bounds = array<i64: 2, 256>}, {transform_indices = @transform_6, window_bounds = array<i64: 1, 16, 256>}]} {
    %c0 = arith.constant 0 : index
    %c0_0 = arith.constant 0 : index
    %0 = vector.load %arg2[%c0, %c0_0] : memref<4x16xf32, #tpu.memory_space<vmem>>, vector<4x16xf32>
    %c0_1 = arith.constant 0 : index
    %c0_2 = arith.constant 0 : index
    %c0_3 = arith.constant 0 : index
    %1 = vector.load %arg1[%c0_1, %c0_2, %c0_3] : memref<1x16x256xf32, #tpu.memory_space<vmem>>, vector<1x16x256xf32>
    %2 = vector.shape_cast %1 : vector<1x16x256xf32> to vector<16x256xf32>
    %cst = arith.constant dense<0.000000e+00> : vector<4x256xf32>
    %3 = tpu.matmul %0, %2, %cst {dimension_numbers = #tpu.dot_dimension_numbers<[1], [0], [0], [1], [0, 0, 1, 1], [], []>, precision = #tpu.contract_precision<fp32>} : vector<4x16xf32>, vector<16x256xf32>, vector<4x256xf32> -> vector<4x256xf32>
    %c0_4 = arith.constant 0 : index
    %c0_5 = arith.constant 0 : index
    %4 = vector.load %arg5[%c0_4, %c0_5] : memref<24x1xf32, #tpu.memory_space<vmem>>, vector<4x1xf32>
    %5 = vector.broadcast %4 : vector<4x1xf32> to vector<4x256xf32>
    %6 = arith.addf %3, %5 : vector<4x256xf32>
    %cst_6 = arith.constant 0.000000e+00 : f32
    %7 = vector.broadcast %cst_6 : f32 to vector<4x256xf32>
    %8 = arith.maximumf %6, %7 : vector<4x256xf32>
    %9 = tpu.iota {dimensions = array<i32: 1>} : vector<1x256xi32>
    %c16_i32 = arith.constant 16 : i32
    %10 = vector.broadcast %c16_i32 : i32 to vector<1x256xi32>
    %11 = arith.cmpi sge, %9, %10 : vector<1x256xi32>
    %c16_i32_7 = arith.constant 16 : i32
    %12 = tpu.dynamic_rotate %8 by %c16_i32_7 dim 1 : vector<4x256xf32>, i32 -> vector<4x256xf32>
    %cst_8 = arith.constant 0.000000e+00 : f32
    %13 = vector.shape_cast %11 : vector<1x256xi1> to vector<1x256xi1>
    %14 = vector.broadcast %13 : vector<1x256xi1> to vector<4x256xi1>
    %15 = vector.broadcast %cst_8 : f32 to vector<4x256xf32>
    %16 = arith.select %14, %12, %15 : vector<4x256xi1>, vector<4x256xf32>
    %c240_i32 = arith.constant 240 : i32
    %17 = vector.broadcast %c240_i32 : i32 to vector<1x256xi32>
    %18 = arith.cmpi slt, %9, %17 : vector<1x256xi32>
    %c240_i32_9 = arith.constant 240 : i32
    %19 = tpu.dynamic_rotate %8 by %c240_i32_9 dim 1 : vector<4x256xf32>, i32 -> vector<4x256xf32>
    %cst_10 = arith.constant 0.000000e+00 : f32
    %20 = vector.shape_cast %18 : vector<1x256xi1> to vector<1x256xi1>
    %21 = vector.broadcast %20 : vector<1x256xi1> to vector<4x256xi1>
    %22 = vector.broadcast %cst_10 : f32 to vector<4x256xf32>
    %23 = arith.select %21, %19, %22 : vector<4x256xi1>, vector<4x256xf32>
    %24 = tpu.concatenate %16, %8, %23 in 0 : vector<4x256xf32>, vector<4x256xf32>, vector<4x256xf32> -> vector<12x256xf32>
    %c0_11 = arith.constant 0 : index
    %c0_12 = arith.constant 0 : index
    %25 = vector.load %arg3[%c0_11, %c0_12] : memref<12x12xf32, #tpu.memory_space<vmem>>, vector<12x12xf32>
    %cst_13 = arith.constant dense<0.000000e+00> : vector<12x256xf32>
    %26 = tpu.matmul %25, %24, %cst_13 {dimension_numbers = #tpu.dot_dimension_numbers<[1], [0], [0], [1], [0, 0, 1, 1], [], []>, precision = #tpu.contract_precision<fp32>} : vector<12x12xf32>, vector<12x256xf32>, vector<12x256xf32> -> vector<12x256xf32>
    %27 = vector.extract_strided_slice %26 {offsets = [4, 0], sizes = [4, 256], strides = [1, 1]} : vector<12x256xf32> to vector<4x256xf32>
    %28 = vector.extract_strided_slice %26 {offsets = [0, 0], sizes = [4, 256], strides = [1, 1]} : vector<12x256xf32> to vector<4x256xf32>
    %c1_i32 = arith.constant 1 : i32
    %29 = tpu.dynamic_rotate %28 by %c1_i32 dim 1 : vector<4x256xf32>, i32 -> vector<4x256xf32>
    %c0_14 = arith.constant 0 : index
    %c0_15 = arith.constant 0 : index
    %30 = vector.load %arg6[%c0_14, %c0_15] : memref<2x256xf32, #tpu.memory_space<vmem>>, vector<1x256xf32>
    %31 = vector.broadcast %30 : vector<1x256xf32> to vector<4x256xf32>
    %32 = arith.mulf %29, %31 : vector<4x256xf32>
    %33 = arith.addf %27, %32 : vector<4x256xf32>
    %34 = vector.extract_strided_slice %26 {offsets = [8, 0], sizes = [4, 256], strides = [1, 1]} : vector<12x256xf32> to vector<4x256xf32>
    %c255_i32 = arith.constant 255 : i32
    %35 = tpu.dynamic_rotate %34 by %c255_i32 dim 1 : vector<4x256xf32>, i32 -> vector<4x256xf32>
    %c1 = arith.constant 1 : index
    %c0_16 = arith.constant 0 : index
    %36 = vector.load %arg6[%c1, %c0_16] : memref<2x256xf32, #tpu.memory_space<vmem>>, vector<1x256xf32>
    %37 = vector.broadcast %36 : vector<1x256xf32> to vector<4x256xf32>
    %38 = arith.mulf %35, %37 : vector<4x256xf32>
    %39 = arith.addf %33, %38 : vector<4x256xf32>
    %c4 = arith.constant 4 : index
    %c0_17 = arith.constant 0 : index
    %40 = vector.load %arg5[%c4, %c0_17] : memref<24x1xf32, #tpu.memory_space<vmem>>, vector<4x1xf32>
    %41 = vector.broadcast %40 : vector<4x1xf32> to vector<4x256xf32>
    %42 = arith.addf %39, %41 : vector<4x256xf32>
    %cst_18 = arith.constant 0.000000e+00 : f32
    %43 = vector.broadcast %cst_18 : f32 to vector<4x256xf32>
    %44 = arith.maximumf %42, %43 : vector<4x256xf32>
    %c0_19 = arith.constant 0 : index
    %c0_20 = arith.constant 0 : index
    %45 = vector.load %arg4[%c0_19, %c0_20] : memref<16x4xf32, #tpu.memory_space<vmem>>, vector<16x4xf32>
    %cst_21 = arith.constant dense<0.000000e+00> : vector<16x256xf32>
    %46 = tpu.matmul %45, %44, %cst_21 {dimension_numbers = #tpu.dot_dimension_numbers<[1], [0], [0], [1], [0, 0, 1, 1], [], []>, precision = #tpu.contract_precision<fp32>} : vector<16x4xf32>, vector<4x256xf32>, vector<16x256xf32> -> vector<16x256xf32>
    %c8 = arith.constant 8 : index
    %c0_22 = arith.constant 0 : index
    %47 = vector.load %arg5[%c8, %c0_22] : memref<24x1xf32, #tpu.memory_space<vmem>>, vector<16x1xf32>
    %48 = vector.broadcast %47 : vector<16x1xf32> to vector<16x256xf32>
    %49 = arith.addf %46, %48 : vector<16x256xf32>
    %c0_23 = arith.constant 0 : index
    %c0_24 = arith.constant 0 : index
    %c0_25 = arith.constant 0 : index
    %50 = vector.load %arg1[%c0_23, %c0_24, %c0_25] : memref<1x16x256xf32, #tpu.memory_space<vmem>>, vector<1x16x256xf32>
    %51 = vector.shape_cast %50 : vector<1x16x256xf32> to vector<16x256xf32>
    %52 = arith.addf %49, %51 : vector<16x256xf32>
    %cst_26 = arith.constant 0.000000e+00 : f32
    %53 = vector.broadcast %cst_26 : f32 to vector<16x256xf32>
    %54 = arith.maximumf %52, %53 : vector<16x256xf32>
    %c0_27 = arith.constant 0 : index
    %c0_28 = arith.constant 0 : index
    %c0_29 = arith.constant 0 : index
    %55 = vector.load %arg7[%c0_27, %c0_28, %c0_29] : memref<1x16x256xf32, #tpu.memory_space<vmem>>, vector<1x16x256xf32>
    %56 = vector.shape_cast %55 : vector<1x16x256xf32> to vector<16x256xf32>
    %57 = vector.shape_cast %54 : vector<16x256xf32> to vector<1x16x256xf32>
    tpu.vector_store %arg7[%c0_27, %c0_28, %c0_29], %57 {strides = array<i32>} : memref<1x16x256xf32, #tpu.memory_space<vmem>>, vector<1x16x256xf32>,
    return
  }
  func.func @transform_0(%arg0: i32) -> (i32, i32, i32) {
    %c0_i32 = arith.constant 0 : i32
    %c0_i32_0 = arith.constant 0 : i32
    %c0_i32_1 = arith.constant 0 : i32
    return %arg0, %c0_i32, %c0_i32_0 : i32, i32, i32
  }
  func.func @transform_1(%arg0: i32) -> (i32, i32) {
    %c0_i32 = arith.constant 0 : i32
    %c0_i32_0 = arith.constant 0 : i32
    %c0_i32_1 = arith.constant 0 : i32
    return %c0_i32, %c0_i32_0 : i32, i32
  }
  func.func @transform_2(%arg0: i32) -> (i32, i32) {
    %c0_i32 = arith.constant 0 : i32
    %c0_i32_0 = arith.constant 0 : i32
    %c0_i32_1 = arith.constant 0 : i32
    return %c0_i32, %c0_i32_0 : i32, i32
  }
  func.func @transform_3(%arg0: i32) -> (i32, i32) {
    %c0_i32 = arith.constant 0 : i32
    %c0_i32_0 = arith.constant 0 : i32
    %c0_i32_1 = arith.constant 0 : i32
    return %c0_i32, %c0_i32_0 : i32, i32
  }
  func.func @transform_4(%arg0: i32) -> (i32, i32) {
    %c0_i32 = arith.constant 0 : i32
    %c0_i32_0 = arith.constant 0 : i32
    %c0_i32_1 = arith.constant 0 : i32
    return %c0_i32, %c0_i32_0 : i32, i32
  }
  func.func @transform_5(%arg0: i32) -> (i32, i32) {
    %c0_i32 = arith.constant 0 : i32
    %c0_i32_0 = arith.constant 0 : i32
    %c0_i32_1 = arith.constant 0 : i32
    return %c0_i32, %c0_i32_0 : i32, i32
  }
  func.func @transform_6(%arg0: i32) -> (i32, i32, i32) {
    %c0_i32 = arith.constant 0 : i32
    %c0_i32_0 = arith.constant 0 : i32
    %c0_i32_1 = arith.constant 0 : i32
    return %arg0, %c0_i32, %c0_i32_0 : i32, i32, i32
  }
}

</mosaic_0001>

<llo_original>
// kernel: tpu_custom_call.1
$region0: #{tpu_custom_call.1}
  #allocation0 [shape = 'u32[]', space=smem, size = 0x4, offset = 0x4, fixed_abs, tag = 'smem constant byte address 0x4 - core index']
  #allocation1 [shape = 'u32[144,128]{1,0:T(1,128)}', space=vmem, size = 0x12000, scoped, tag = 'internal scratch']
  %s0 = inlined_call_operand.hbm [shape: f32[2,16,256], index: 0, kind: input, shape index: {}]
  %s1 = inlined_call_operand.vmem [shape: f32[4,16], index: 1, kind: input, shape index: {}]
  %s2 = inlined_call_operand.vmem [shape: f32[12,12], index: 2, kind: input, shape index: {}]
  %s3 = inlined_call_operand.vmem [shape: f32[16,4], index: 3, kind: input, shape index: {}]
  %s4 = inlined_call_operand.vmem [shape: f32[24,1], index: 4, kind: input, shape index: {}]
  %s5 = inlined_call_operand.vmem [shape: f32[2,256], index: 5, kind: input, shape index: {}]
  %s6 = inlined_call_operand.hbm [shape: f32[2,16,256], index: 6, kind: output, shape index: {}]
  %s7 = sld [smem:[#allocation0]]
  $region61: #{tpu_custom_call.1} parent=0
    _
  %s9 = ssub.s32 1, %s7
  %s10 = scalar_select 0, %s9, %s7
  $region1: #{tpu_custom_call.1} parent=0
    #allocation2 [shape = 'u8[32768]{0}', space=vmem, size = 0x8000, scoped, tag = 'input window, operand 0']
    #allocation3 [shape = 's32[2]{0}', space=sflag, size = 0x8, scoped, tag = 'scoped memory for tpu_custom_call.1']
    #allocation4 [shape = 's32[2]{0}', space=sflag, size = 0x8, scoped, tag = 'scoped memory for tpu_custom_call.1']
    #allocation5 [shape = 'u8[32768]{0}', space=vmem, size = 0x8000, scoped, tag = 'output window, operand 0']
    %11 = vsyncpa [#allocation3], 0
    %s12 = scalar_lea.sflag [#allocation3], 1
    %13 = vsyncpa %s12, 0
    %14 = vsyncpa [#allocation4], 0
    %s15 = scalar_lea.sflag [#allocation4], 1
    %16 = vsyncpa %s15, 0
    loop: start=0, step=1, limit=4
    $region2: #{tpu_custom_call.1} parent=1 // loop_pre_header
      _
    $region3: #{tpu_custom_call.1} parent=1 // loop_header
      %s18 = sphi 0, %s22
      %p19 = scmp.ge.s32.totalorder %s18, 4
      %s28 = sphi 0, %s30
      %s31 = sphi 0, %s28
      %s32 = sphi 0, %s31
      %s48 = sphi 0, %s32
      %s52 = sphi 0, %s52
      %s54 = sphi 0, %s52
      %s55 = sphi 0, %s54
      %s69 = sphi 0, %s55
      %s73 = sphi 0, %s73
      %s75 = sphi 0, %s73
      %s76 = sphi 0, %s75
      %s90 = sphi 0, %s76
      %s94 = sphi 0, %s94
      %s96 = sphi 0, %s94
      %s97 = sphi 0, %s96
      %s111 = sphi 0, %s97
      %s115 = sphi 0, %s115
      %s117 = sphi 0, %s115
      %s118 = sphi 0, %s117
      %s132 = sphi 0, %s118
      %s136 = sphi 0, %s136
      %s138 = sphi 0, %s136
      %s139 = sphi 0, %s138
      %s153 = sphi 0, %s139
      %s159 = sphi 0, %s161
      %s162 = sphi 0, %s159
      %s163 = sphi 0, %s162
      %s179 = sphi 0, %s163
    $region4: #{tpu_custom_call.1} parent=1 // loop_header_branch
      %21 = sbr.rel (%p19) target = $region8
    $region5: #{tpu_custom_call.1} parent=1 // loop_body
      %s23 = ssub.s32 %s18, 1
      %s24 = ssub.s32 %s18, 2
      %s25 = sadd.s32 %s18, 1
      %s26 = ssub.s32 %s18, %s25
      %p27 = scmp.eq.s32.totalorder %s26, 0
      %s29 = sadd.s32 %s28, 1
      %s30 = scalar_select %p27, %s28, %s29
      %p33 = pneg %p27
      %p34 = scmp.eq.s32.totalorder %s18, 1
      %p35 = por %p33, %p34
      %p36 = scmp.ne.s32.totalorder %s28, %s31
      %p37 = scmp.eq.s32.totalorder %s18, 0
      %p38 = por %p36, %p37
      %p39 = scmp.ne.s32.totalorder %s28, %s31
      %p40 = scmp.eq.s32.totalorder %s23, 1
      %p41 = por %p39, %p40
      %p42 = scmp.ne.s32.totalorder %s31, %s32
      %p43 = scmp.eq.s32.totalorder %s23, 0
      %p44 = por %p42, %p43
      %p45 = scmp.ne.s32.totalorder %s31, %s32
      %p46 = scmp.eq.s32.totalorder %s24, 1
      %p47 = por %p45, %p46
      %p49 = scmp.ne.s32.totalorder %s32, %s48
      %p50 = scmp.eq.s32.totalorder %s24, 0
      %p51 = por %p49, %p50
      %s53 = sadd.s32 %s52, 1
      %p56 = scmp.eq.s32.totalorder %s18, 1
      %p57 = scmp.ne.s32.totalorder %s52, %s54
      %p58 = scmp.eq.s32.totalorder %s18, 0
      %p59 = por %p57, %p58
      %p60 = scmp.ne.s32.totalorder %s52, %s54
      %p61 = scmp.eq.s32.totalorder %s23, 1
      %p62 = por %p60, %p61
      %p63 = scmp.ne.s32.totalorder %s54, %s55
      %p64 = scmp.eq.s32.totalorder %s23, 0
      %p65 = por %p63, %p64
      %p66 = scmp.ne.s32.totalorder %s54, %s55
      %p67 = scmp.eq.s32.totalorder %s24, 1
      %p68 = por %p66, %p67
      %p70 = scmp.ne.s32.totalorder %s55, %s69
      %p71 = scmp.eq.s32.totalorder %s24, 0
      %p72 = por %p70, %p71
      %s74 = sadd.s32 %s73, 1
      %p77 = scmp.eq.s32.totalorder %s18, 1
      %p78 = scmp.ne.s32.totalorder %s73, %s75
      %p79 = scmp.eq.s32.totalorder %s18, 0
      %p80 = por %p78, %p79
      %p81 = scmp.ne.s32.totalorder %s73, %s75
      %p82 = scmp.eq.s32.totalorder %s23, 1
      %p83 = por %p81, %p82
      %p84 = scmp.ne.s32.totalorder %s75, %s76
      %p85 = scmp.eq.s32.totalorder %s23, 0
      %p86 = por %p84, %p85
      %p87 = scmp.ne.s32.totalorder %s75, %s76
      %p88 = scmp.eq.s32.totalorder %s24, 1
      %p89 = por %p87, %p88
      %p91 = scmp.ne.s32.totalorder %s76, %s90
      %p92 = scmp.eq.s32.totalorder %s24, 0
      %p93 = por %p91, %p92
      %s95 = sadd.s32 %s94, 1
      %p98 = scmp.eq.s32.totalorder %s18, 1
      %p99 = scmp.ne.s32.totalorder %s94, %s96
      %p100 = scmp.eq.s32.totalorder %s18, 0
      %p101 = por %p99, %p100
      %p102 = scmp.ne.s32.totalorder %s94, %s96
      %p103 = scmp.eq.s32.totalorder %s23, 1
      %p104 = por %p102, %p103
      %p105 = scmp.ne.s32.totalorder %s96, %s97
      %p106 = scmp.eq.s32.totalorder %s23, 0
      %p107 = por %p105, %p106
      %p108 = scmp.ne.s32.totalorder %s96, %s97
      %p109 = scmp.eq.s32.totalorder %s24, 1
      %p110 = por %p108, %p109
      %p112 = scmp.ne.s32.totalorder %s97, %s111
      %p113 = scmp.eq.s32.totalorder %s24, 0
      %p114 = por %p112, %p113
      %s116 = sadd.s32 %s115, 1
      %p119 = scmp.eq.s32.totalorder %s18, 1
      %p120 = scmp.ne.s32.totalorder %s115, %s117
      %p121 = scmp.eq.s32.totalorder %s18, 0
      %p122 = por %p120, %p121
      %p123 = scmp.ne.s32.totalorder %s115, %s117
      %p124 = scmp.eq.s32.totalorder %s23, 1
      %p125 = por %p123, %p124
      %p126 = scmp.ne.s32.totalorder %s117, %s118
      %p127 = scmp.eq.s32.totalorder %s23, 0
      %p128 = por %p126, %p127
      %p129 = scmp.ne.s32.totalorder %s117, %s118
      %p130 = scmp.eq.s32.totalorder %s24, 1
      %p131 = por %p129, %p130
      %p133 = scmp.ne.s32.totalorder %s118, %s132
      %p134 = scmp.eq.s32.totalorder %s24, 0
      %p135 = por %p133, %p134
      %s137 = sadd.s32 %s136, 1
      %p140 = scmp.eq.s32.totalorder %s18, 1
      %p141 = scmp.ne.s32.totalorder %s136, %s138
      %p142 = scmp.eq.s32.totalorder %s18, 0
      %p143 = por %p141, %p142
      %p144 = scmp.ne.s32.totalorder %s136, %s138
      %p145 = scmp.eq.s32.totalorder %s23, 1
      %p146 = por %p144, %p145
      %p147 = scmp.ne.s32.totalorder %s138, %s139
      %p148 = scmp.eq.s32.totalorder %s23, 0
      %p149 = por %p147, %p148
      %p150 = scmp.ne.s32.totalorder %s138, %s139
      %p151 = scmp.eq.s32.totalorder %s24, 1
      %p152 = por %p150, %p151
      %p154 = scmp.ne.s32.totalorder %s139, %s153
      %p155 = scmp.eq.s32.totalorder %s24, 0
      %p156 = por %p154, %p155
      %s157 = ssub.s32 %s18, %s25
      %p158 = scmp.eq.s32.totalorder %s157, 0
      %s160 = sadd.s32 %s159, 1
      %s161 = scalar_select %p158, %s159, %s160
      %p164 = pneg %p158
      %p165 = scmp.eq.s32.totalorder %s18, 1
      %p166 = por %p164, %p165
      %p167 = scmp.ne.s32.totalorder %s159, %s162
      %p168 = scmp.eq.s32.totalorder %s18, 0
      %p169 = por %p167, %p168
      %p170 = scmp.ne.s32.totalorder %s159, %s162
      %p171 = scmp.eq.s32.totalorder %s23, 1
      %p172 = por %p170, %p171
      %p173 = scmp.ne.s32.totalorder %s162, %s163
      %p174 = scmp.eq.s32.totalorder %s23, 0
      %p175 = por %p173, %p174
      %p176 = scmp.ne.s32.totalorder %s162, %s163
      %p177 = scmp.eq.s32.totalorder %s24, 1
      %p178 = por %p176, %p177
      %p180 = scmp.ne.s32.totalorder %s163, %s179
      %p181 = scmp.eq.s32.totalorder %s24, 0
      %p182 = por %p180, %p181
      %p183 = scmp.le.s32.totalorder 1, %s18
      %p184 = scmp.lt.s32.totalorder %s18, 3
      %p185 = pnand %p183, %p184
      %p186 = pneg %p185
      // Predicated region
      $region9: #{tpu_custom_call.1} parent=5 // pred_check
        _
      $region10: #{tpu_custom_call.1} parent=5 // pred_check_branch
        %188 = sbr.rel (%p185) target = $region12
      $region11: #{tpu_custom_call.1} parent=5 // pred_region
        %s189 = ssub.s32 %s18, 1
        // Predicated region
        $region13: #{tpu_custom_call.1} parent=11 // pred_check
          %p190 = pneg %p65
        $region14: #{tpu_custom_call.1} parent=11 // pred_check_branch
          %192 = sbr.rel (%p190) target = $region16
        $region15: #{tpu_custom_call.1} parent=11 // pred_region
          _
        $region16: #{tpu_custom_call.1} parent=11 // pred_fallthru
          _
        // Predicated region
        $region17: #{tpu_custom_call.1} parent=11 // pred_check
          %p193 = pneg %p86
        $region18: #{tpu_custom_call.1} parent=11 // pred_check_branch
          %195 = sbr.rel (%p193) target = $region20
        $region19: #{tpu_custom_call.1} parent=11 // pred_region
          _
        $region20: #{tpu_custom_call.1} parent=11 // pred_fallthru
          _
        // Predicated region
        $region21: #{tpu_custom_call.1} parent=11 // pred_check
          %p196 = pneg %p107
        $region22: #{tpu_custom_call.1} parent=11 // pred_check_branch
          %198 = sbr.rel (%p196) target = $region24
        $region23: #{tpu_custom_call.1} parent=11 // pred_region
          _
        $region24: #{tpu_custom_call.1} parent=11 // pred_fallthru
          _
        // Predicated region
        $region25: #{tpu_custom_call.1} parent=11 // pred_check
          %p199 = pneg %p128
        $region26: #{tpu_custom_call.1} parent=11 // pred_check_branch
          %201 = sbr.rel (%p199) target = $region28
        $region27: #{tpu_custom_call.1} parent=11 // pred_region
          _
        $region28: #{tpu_custom_call.1} parent=11 // pred_fallthru
          _
        // Predicated region
        $region29: #{tpu_custom_call.1} parent=11 // pred_check
          %p202 = pneg %p149
        $region30: #{tpu_custom_call.1} parent=11 // pred_check_branch
          %204 = sbr.rel (%p202) target = $region32
        $region31: #{tpu_custom_call.1} parent=11 // pred_region
          _
        $region32: #{tpu_custom_call.1} parent=11 // pred_fallthru
          _
      $region12: #{tpu_custom_call.1} parent=5 // pred_fallthru
        _
      %p205 = scmp.lt.s32.totalorder %s18, 2
      // Predicated region
      $region33: #{tpu_custom_call.1} parent=5 // pred_check
        %p206 = pneg %p205
      $region34: #{tpu_custom_call.1} parent=5 // pred_check_branch
        %208 = sbr.rel (%p206) target = $region36
      $region35: #{tpu_custom_call.1} parent=5 // pred_region
        // Predicated region
        $region37: #{tpu_custom_call.1} parent=35 // pred_check
          %p209 = pneg %p38
        $region38: #{tpu_custom_call.1} parent=35 // pred_check_branch
          %211 = sbr.rel (%p209) target = $region40
        $region39: #{tpu_custom_call.1} parent=35 // pred_region
          %s212 = sand.u32 %s28, 1
          %s213 = scalar_lea.sflag [#allocation3], %s212
          %s214 = sand.u32 %s28, 1
          %s215 = smul.addr %s214, 32
          %s216 = scalar_lea.vmem [#allocation2], %s215
          %s218 = ssub.s32 512, 512
          %219 = vsyncadd %s213, %s218
          %s220 = smul.addr %s18, 4
          %s221 = smul.addr %s220, 128
          %s222 = scalar_lea.hbm %s0, %s221
          %s223 = sshll.u32 %s216, 4
          %s224 = int_to_ptr.vmem [resolvable:$true] %s223
          %229 = dma.hbm_to_vmem [thread:$0]  %s222, 512, %s224, %s213, 256, 256, 16
        $region40: #{tpu_custom_call.1} parent=35 // pred_fallthru
          _
      $region36: #{tpu_custom_call.1} parent=5 // pred_fallthru
        _
      %p230 = scmp.le.s32.totalorder 1, %s18
      %p231 = scmp.lt.s32.totalorder %s18, 3
      %p232 = pnand %p230, %p231
      %p233 = pneg %p232
      // Predicated region
      $region41: #{tpu_custom_call.1} parent=5 // pred_check
        _
      $region42: #{tpu_custom_call.1} parent=5 // pred_check_branch
        %235 = sbr.rel (%p232) target = $region44
      $region43: #{tpu_custom_call.1} parent=5 // pred_region
        %s236 = ssub.s32 %s18, 1
        %s237 = sand.u32 %s31, 1
        %s238 = scalar_lea.sflag [#allocation3], %s237
        %s239 = sand.u32 %s31, 1
        %s240 = smul.addr %s239, 32
        %s241 = scalar_lea.vmem [#allocation2], %s240
        // Predicated region
        $region45: #{tpu_custom_call.1} parent=43 // pred_check
          %p242 = pneg %p44
        $region46: #{tpu_custom_call.1} parent=43 // pred_check_branch
          %244 = sbr.rel (%p242) target = $region48
        $region47: #{tpu_custom_call.1} parent=43 // pred_region
          %245 = dma.done %s238, 512
        $region48: #{tpu_custom_call.1} parent=43 // pred_fallthru
          _
        %s246 = sand.u32 %s31, 1
        %s247 = scalar_lea.sflag [#allocation3], %s246
        %s248 = sand.u32 %s31, 1
        %s249 = smul.addr %s248, 32
        %s250 = scalar_lea.vmem [#allocation2], %s249
        %p251 = pneg %p44
        %p252 = pneg %p41
        %p253 = pneg %p65
        %p254 = pneg %p62
        %p255 = pneg %p86
        %p256 = pneg %p83
        %p257 = pneg %p107
        %p258 = pneg %p104
        %p259 = pneg %p128
        %p260 = pneg %p125
        %p261 = pneg %p149
        %p262 = pneg %p146
        %p263 = pneg %p175
        %p264 = pneg %p172
        %s265 = sand.u32 %s162, 1
        %s266 = scalar_lea.sflag [#allocation4], %s265
        %s267 = sand.u32 %s162, 1
        %s268 = smul.addr %s267, 32
        %s269 = scalar_lea.vmem [#allocation5], %s268
        %v270 = vld [vmem:[%s1] sm:$0xf]
        %v271 = vld [vmem:[%s241] sm:$0xff]
        %v272 = vld [vmem:[%s241 + $0x8] sm:$0xff]
        %v273 = vld [vmem:[%s241 + $0x10] sm:$0xff]
        %v274 = vld [vmem:[%s241 + $0x18] sm:$0xff]
        %v275 = vld [vmem:[%s4] sm:$0xf]
        %277 = vset.pattern.permute.xlu0 0
        %278 = vperm.xlu0 %277, %v275
        %v279 = vpop.permute.xlu0 %278
        %vm281 = vcmask 130048
        %v283 = vsel %vm281, %v270, 0
        %285 = vmatprep.subr.mxu0 0.0
        %286 = vmatpush1.msra.mxu0 0.0
        %287 = vmatprep.subr.mxu0 0.0
        %288 = vmatpush1.msra.mxu0 0.0
        %289 = vmatprep.subr.mxu0 0.0
        %290 = vmatpush1.msra.mxu0 0.0
        %291 = vmatprep.subr.mxu0 0.0
        %292 = vmatpush1.msra.mxu0 0.0
        %293 = vmatprep.subr.mxu0 0.0
        %294 = vmatpush1.msra.mxu0 0.0
        %295 = vmatprep.subr.mxu0 0.0
        %296 = vmatpush1.msra.mxu0 0.0
        %297 = vmatprep.subr.mxu0 0.0
        %298 = vmatpush1.msra.mxu0 0.0
        %299 = vmatprep.subr.mxu0 0.0
        %300 = vmatpush1.msra.mxu0 0.0
        %301 = vmatprep.subr.mxu0 0.0
        %302 = vmatpush1.msra.mxu0 0.0
        %303 = vmatprep.subr.mxu0 0.0
        %304 = vmatpush1.msra.mxu0 0.0
        %305 = vmatprep.subr.mxu0 0.0
        %306 = vmatpush1.msra.mxu0 0.0
        %307 = vmatprep.subr.mxu0 0.0
        %308 = vmatpush1.msra.mxu0 0.0
        %309 = vmatprep.subr.mxu0 0.0
        %310 = vmatpush1.msra.mxu0 0.0
        %311 = vmatprep.subr.mxu0 0.0
        %312 = vmatpush1.msra.mxu0 0.0
        %v313 = vand.u32 %v274, 4294901760
        %314 = vmatprep.subr.mxu0 %v313
        %v315 = vand.u32 %v273, 4294901760
        %316 = vmatpush1.msra.mxu0 %v315
        %v317 = vand.u32 %v272, 4294901760
        %318 = vmatprep.subr.mxu0 %v317
        %v319 = vand.u32 %v271, 4294901760
        %320 = vmatpush1.msra.mxu0 %v319
        %321 = vmatprep.subr.mxu0 0.0
        %322 = vmatpush2.msra.mxu0 0.0
        %323 = vmatprep.subr.mxu0 0.0
        %324 = vmatpush2.msra.mxu0 0.0
        %325 = vmatprep.subr.mxu0 0.0
        %326 = vmatpush2.msra.mxu0 0.0
        %327 = vmatprep.subr.mxu0 0.0
        %328 = vmatpush2.msra.mxu0 0.0
        %329 = vmatprep.subr.mxu0 0.0
        %330 = vmatpush2.msra.mxu0 0.0
        %331 = vmatprep.subr.mxu0 0.0
        %332 = vmatpush2.msra.mxu0 0.0
        %333 = vmatprep.subr.mxu0 0.0
        %334 = vmatpush2.msra.mxu0 0.0
        %335 = vmatprep.subr.mxu0 0.0
        %336 = vmatpush2.msra.mxu0 0.0
        %337 = vmatprep.subr.mxu0 0.0
        %338 = vmatpush2.msra.mxu0 0.0
        %339 = vmatprep.subr.mxu0 0.0
        %340 = vmatpush2.msra.mxu0 0.0
        %341 = vmatprep.subr.mxu0 0.0
        %342 = vmatpush2.msra.mxu0 0.0
        %343 = vmatprep.subr.mxu0 0.0
        %344 = vmatpush2.msra.mxu0 0.0
        %345 = vmatprep.subr.mxu0 0.0
        %346 = vmatpush2.msra.mxu0 0.0
        %347 = vmatprep.subr.mxu0 0.0
        %348 = vmatpush2.msra.mxu0 0.0
        %349 = vmatprep.subr.mxu0 0.0
        %350 = vmatpush2.msra.mxu0 0.0
        %351 = vmatprep.subr.mxu0 0.0
        %352 = vmatpush2.msra.mxu0 0.0
        %353 = vmatprep.mubr.f32.mxu0 0.0
        %v354 = vand.u32 %v283, 4294901760
        %v355 = vsub.f32 %v283, %v354
        %v356 = vand.u32 %v355, 4294901760
        %v357 = vsub.f32 %v355, %v356
        %v358 = vand.u32 %v357, 4294901760
        %359 = vmatmul.mubr.f32.gmra.mxu0 %v358
        %v360 = vpop.f32.mrf.mxu0
        %v361 = vadd.f32 %v279, %v360
        %v362 = vpop.f32.mrf.mxu0
        %v363 = vadd.f32 %v279, %v362
        %364 = vdwg.mxu0
        %365 = vmatprep.subr.mxu0 0.0
        %366 = vmatpush1.msra.mxu0 0.0
        %367 = vmatprep.subr.mxu0 0.0
        %368 = vmatpush1.msra.mxu0 0.0
        %369 = vmatprep.subr.mxu0 0.0
        %370 = vmatpush1.msra.mxu0 0.0
        %371 = vmatprep.subr.mxu0 0.0
        %372 = vmatpush1.msra.mxu0 0.0
        %373 = vmatprep.subr.mxu0 0.0
        %374 = vmatpush1.msra.mxu0 0.0
        %375 = vmatprep.subr.mxu0 0.0
        %376 = vmatpush1.msra.mxu0 0.0
        %377 = vmatprep.subr.mxu0 0.0
        %378 = vmatpush1.msra.mxu0 0.0
        %379 = vmatprep.subr.mxu0 0.0
        %380 = vmatpush1.msra.mxu0 0.0
        %381 = vmatprep.subr.mxu0 0.0
        %382 = vmatpush1.msra.mxu0 0.0
        %383 = vmatprep.subr.mxu0 0.0
        %384 = vmatpush1.msra.mxu0 0.0
        %385 = vmatprep.subr.mxu0 0.0
        %386 = vmatpush1.msra.mxu0 0.0
        %387 = vmatprep.subr.mxu0 0.0
        %388 = vmatpush1.msra.mxu0 0.0
        %389 = vmatprep.subr.mxu0 0.0
        %390 = vmatpush1.msra.mxu0 0.0
        %391 = vmatprep.subr.mxu0 0.0
        %392 = vmatpush1.msra.mxu0 0.0
        %v393 = vand.u32 %v274, 4294901760
        %v394 = vsub.f32 %v274, %v393
        %v395 = vand.u32 %v394, 4294901760
        %v396 = vsub.f32 %v394, %v395
        %v397 = vand.u32 %v396, 4294901760
        %398 = vmatprep.subr.mxu0 %v397
        %v399 = vand.u32 %v273, 4294901760
        %v400 = vsub.f32 %v273, %v399
        %v401 = vand.u32 %v400, 4294901760
        %v402 = vsub.f32 %v400, %v401
        %v403 = vand.u32 %v402, 4294901760
        %404 = vmatpush1.msra.mxu0 %v403
        %v405 = vand.u32 %v272, 4294901760
        %v406 = vsub.f32 %v272, %v405
        %v407 = vand.u32 %v406, 4294901760
        %v408 = vsub.f32 %v406, %v407
        %v409 = vand.u32 %v408, 4294901760
        %410 = vmatprep.subr.mxu0 %v409
        %v411 = vand.u32 %v271, 4294901760
        %v412 = vsub.f32 %v271, %v411
        %v413 = vand.u32 %v412, 4294901760
        %v414 = vsub.f32 %v412, %v413
        %v415 = vand.u32 %v414, 4294901760
        %416 = vmatpush1.msra.mxu0 %v415
        %417 = vmatprep.subr.mxu0 0.0
        %418 = vmatpush2.msra.mxu0 0.0
        %419 = vmatprep.subr.mxu0 0.0
        %420 = vmatpush2.msra.mxu0 0.0
        %421 = vmatprep.subr.mxu0 0.0
        %422 = vmatpush2.msra.mxu0 0.0
        %423 = vmatprep.subr.mxu0 0.0
        %424 = vmatpush2.msra.mxu0 0.0
        %425 = vmatprep.subr.mxu0 0.0
        %426 = vmatpush2.msra.mxu0 0.0
        %427 = vmatprep.subr.mxu0 0.0
        %428 = vmatpush2.msra.mxu0 0.0
        %429 = vmatprep.subr.mxu0 0.0
        %430 = vmatpush2.msra.mxu0 0.0
        %431 = vmatprep.subr.mxu0 0.0
        %432 = vmatpush2.msra.mxu0 0.0
        %433 = vmatprep.subr.mxu0 0.0
        %434 = vmatpush2.msra.mxu0 0.0
        %435 = vmatprep.subr.mxu0 0.0
        %436 = vmatpush2.msra.mxu0 0.0
        %437 = vmatprep.subr.mxu0 0.0
        %438 = vmatpush2.msra.mxu0 0.0
        %439 = vmatprep.subr.mxu0 0.0
        %440 = vmatpush2.msra.mxu0 0.0
        %441 = vmatprep.subr.mxu0 0.0
        %442 = vmatpush2.msra.mxu0 0.0
        %443 = vmatprep.subr.mxu0 0.0
        %444 = vmatpush2.msra.mxu0 0.0
        %445 = vmatprep.subr.mxu0 0.0
        %446 = vmatpush2.msra.mxu0 0.0
        %447 = vmatprep.subr.mxu0 0.0
        %448 = vmatpush2.msra.mxu0 0.0
        %449 = vmatprep.mubr.f32.mxu0 0.0
        %v450 = vand.u32 %v283, 4294901760
        %451 = vmatmul.mubr.f32.gmra.mxu0 %v450
        %v452 = vpop.f32.mrf.mxu0
        %v453 = vadd.f32 %v361, %v452
        %v454 = vpop.f32.mrf.mxu0
        %v455 = vadd.f32 %v363, %v454
        %456 = vdwg.mxu0
        %457 = vmatprep.subr.mxu0 0.0
        %458 = vmatpush1.msra.mxu0 0.0
        %459 = vmatprep.subr.mxu0 0.0
        %460 = vmatpush1.msra.mxu0 0.0
        %461 = vmatprep.subr.mxu0 0.0
        %462 = vmatpush1.msra.mxu0 0.0
        %463 = vmatprep.subr.mxu0 0.0
        %464 = vmatpush1.msra.mxu0 0.0
        %465 = vmatprep.subr.mxu0 0.0
        %466 = vmatpush1.msra.mxu0 0.0
        %467 = vmatprep.subr.mxu0 0.0
        %468 = vmatpush1.msra.mxu0 0.0
        %469 = vmatprep.subr.mxu0 0.0
        %470 = vmatpush1.msra.mxu0 0.0
        %471 = vmatprep.subr.mxu0 0.0
        %472 = vmatpush1.msra.mxu0 0.0
        %473 = vmatprep.subr.mxu0 0.0
        %474 = vmatpush1.msra.mxu0 0.0
        %475 = vmatprep.subr.mxu0 0.0
        %476 = vmatpush1.msra.mxu0 0.0
        %477 = vmatprep.subr.mxu0 0.0
        %478 = vmatpush1.msra.mxu0 0.0
        %479 = vmatprep.subr.mxu0 0.0
        %480 = vmatpush1.msra.mxu0 0.0
        %481 = vmatprep.subr.mxu0 0.0
        %482 = vmatpush1.msra.mxu0 0.0
        %483 = vmatprep.subr.mxu0 0.0
        %484 = vmatpush1.msra.mxu0 0.0
        %v485 = vand.u32 %v274, 4294901760
        %v486 = vsub.f32 %v274, %v485
        %487 = vmatprep.subr.mxu0 %v486
        %v488 = vand.u32 %v273, 4294901760
        %v489 = vsub.f32 %v273, %v488
        %490 = vmatpush1.msra.mxu0 %v489
        %v491 = vand.u32 %v272, 4294901760
        %v492 = vsub.f32 %v272, %v491
        %493 = vmatprep.subr.mxu0 %v492
        %v494 = vand.u32 %v271, 4294901760
        %v495 = vsub.f32 %v271, %v494
        %496 = vmatpush1.msra.mxu0 %v495
        %497 = vmatprep.subr.mxu0 0.0
        %498 = vmatpush2.msra.mxu0 0.0
        %499 = vmatprep.subr.mxu0 0.0
        %500 = vmatpush2.msra.mxu0 0.0
        %501 = vmatprep.subr.mxu0 0.0
        %502 = vmatpush2.msra.mxu0 0.0
        %503 = vmatprep.subr.mxu0 0.0
        %504 = vmatpush2.msra.mxu0 0.0
        %505 = vmatprep.subr.mxu0 0.0
        %506 = vmatpush2.msra.mxu0 0.0
        %507 = vmatprep.subr.mxu0 0.0
        %508 = vmatpush2.msra.mxu0 0.0
        %509 = vmatprep.subr.mxu0 0.0
        %510 = vmatpush2.msra.mxu0 0.0
        %511 = vmatprep.subr.mxu0 0.0
        %512 = vmatpush2.msra.mxu0 0.0
        %513 = vmatprep.subr.mxu0 0.0
        %514 = vmatpush2.msra.mxu0 0.0
        %515 = vmatprep.subr.mxu0 0.0
        %516 = vmatpush2.msra.mxu0 0.0
        %517 = vmatprep.subr.mxu0 0.0
        %518 = vmatpush2.msra.mxu0 0.0
        %519 = vmatprep.subr.mxu0 0.0
        %520 = vmatpush2.msra.mxu0 0.0
        %521 = vmatprep.subr.mxu0 0.0
        %522 = vmatpush2.msra.mxu0 0.0
        %523 = vmatprep.subr.mxu0 0.0
        %524 = vmatpush2.msra.mxu0 0.0
        %525 = vmatprep.subr.mxu0 0.0
        %526 = vmatpush2.msra.mxu0 0.0
        %527 = vmatprep.subr.mxu0 0.0
        %528 = vmatpush2.msra.mxu0 0.0
        %529 = vmatprep.mubr.f32.mxu0 0.0
        %v530 = vand.u32 %v283, 4294901760
        %v531 = vsub.f32 %v283, %v530
        %532 = vmatmul.mubr.f32.gmra.mxu0 %v531
        %v533 = vpop.f32.mrf.mxu0
        %v534 = vadd.f32 %v453, %v533
        %v535 = vpop.f32.mrf.mxu0
        %v536 = vadd.f32 %v455, %v535
        %537 = vdwg.mxu0
        %538 = vmatprep.subr.mxu0 0.0
        %539 = vmatpush1.msra.mxu0 0.0
        %540 = vmatprep.subr.mxu0 0.0
        %541 = vmatpush1.msra.mxu0 0.0
        %542 = vmatprep.subr.mxu0 0.0
        %543 = vmatpush1.msra.mxu0 0.0
        %544 = vmatprep.subr.mxu0 0.0
        %545 = vmatpush1.msra.mxu0 0.0
        %546 = vmatprep.subr.mxu0 0.0
        %547 = vmatpush1.msra.mxu0 0.0
        %548 = vmatprep.subr.mxu0 0.0
        %549 = vmatpush1.msra.mxu0 0.0
        %550 = vmatprep.subr.mxu0 0.0
        %551 = vmatpush1.msra.mxu0 0.0
        %552 = vmatprep.subr.mxu0 0.0
        %553 = vmatpush1.msra.mxu0 0.0
        %554 = vmatprep.subr.mxu0 0.0
        %555 = vmatpush1.msra.mxu0 0.0
        %556 = vmatprep.subr.mxu0 0.0
        %557 = vmatpush1.msra.mxu0 0.0
        %558 = vmatprep.subr.mxu0 0.0
        %559 = vmatpush1.msra.mxu0 0.0
        %560 = vmatprep.subr.mxu0 0.0
        %561 = vmatpush1.msra.mxu0 0.0
        %562 = vmatprep.subr.mxu0 0.0
        %563 = vmatpush1.msra.mxu0 0.0
        %564 = vmatprep.subr.mxu0 0.0
        %565 = vmatpush1.msra.mxu0 0.0
        %v566 = vand.u32 %v274, 4294901760
        %567 = vmatprep.subr.mxu0 %v566
        %v568 = vand.u32 %v273, 4294901760
        %569 = vmatpush1.msra.mxu0 %v568
        %v570 = vand.u32 %v272, 4294901760
        %571 = vmatprep.subr.mxu0 %v570
        %v572 = vand.u32 %v271, 4294901760
        %573 = vmatpush1.msra.mxu0 %v572
        %574 = vmatprep.subr.mxu0 0.0
        %575 = vmatpush2.msra.mxu0 0.0
        %576 = vmatprep.subr.mxu0 0.0
        %577 = vmatpush2.msra.mxu0 0.0
        %578 = vmatprep.subr.mxu0 0.0
        %579 = vmatpush2.msra.mxu0 0.0
        %580 = vmatprep.subr.mxu0 0.0
        %581 = vmatpush2.msra.mxu0 0.0
        %582 = vmatprep.subr.mxu0 0.0
        %583 = vmatpush2.msra.mxu0 0.0
        %584 = vmatprep.subr.mxu0 0.0
        %585 = vmatpush2.msra.mxu0 0.0
        %586 = vmatprep.subr.mxu0 0.0
        %587 = vmatpush2.msra.mxu0 0.0
        %588 = vmatprep.subr.mxu0 0.0
        %589 = vmatpush2.msra.mxu0 0.0
        %590 = vmatprep.subr.mxu0 0.0
        %591 = vmatpush2.msra.mxu0 0.0
        %592 = vmatprep.subr.mxu0 0.0
        %593 = vmatpush2.msra.mxu0 0.0
        %594 = vmatprep.subr.mxu0 0.0
        %595 = vmatpush2.msra.mxu0 0.0
        %596 = vmatprep.subr.mxu0 0.0
        %597 = vmatpush2.msra.mxu0 0.0
        %598 = vmatprep.subr.mxu0 0.0
        %599 = vmatpush2.msra.mxu0 0.0
        %600 = vmatprep.subr.mxu0 0.0
        %601 = vmatpush2.msra.mxu0 0.0
        %602 = vmatprep.subr.mxu0 0.0
        %603 = vmatpush2.msra.mxu0 0.0
        %604 = vmatprep.subr.mxu0 0.0
        %605 = vmatpush2.msra.mxu0 0.0
        %606 = vmatprep.mubr.f32.mxu0 0.0
        %v607 = vand.u32 %v283, 4294901760
        %v608 = vsub.f32 %v283, %v607
        %v609 = vand.u32 %v608, 4294901760
        %610 = vmatmul.mubr.f32.gmra.mxu0 %v609
        %v611 = vpop.f32.mrf.mxu0
        %v612 = vadd.f32 %v534, %v611
        %v613 = vpop.f32.mrf.mxu0
        %v614 = vadd.f32 %v536, %v613
        %615 = vdwg.mxu0
        %616 = vmatprep.subr.mxu0 0.0
        %617 = vmatpush1.msra.mxu0 0.0
        %618 = vmatprep.subr.mxu0 0.0
        %619 = vmatpush1.msra.mxu0 0.0
        %620 = vmatprep.subr.mxu0 0.0
        %621 = vmatpush1.msra.mxu0 0.0
        %622 = vmatprep.subr.mxu0 0.0
        %623 = vmatpush1.msra.mxu0 0.0
        %624 = vmatprep.subr.mxu0 0.0
        %625 = vmatpush1.msra.mxu0 0.0
        %626 = vmatprep.subr.mxu0 0.0
        %627 = vmatpush1.msra.mxu0 0.0
        %628 = vmatprep.subr.mxu0 0.0
        %629 = vmatpush1.msra.mxu0 0.0
        %630 = vmatprep.subr.mxu0 0.0
        %631 = vmatpush1.msra.mxu0 0.0
        %632 = vmatprep.subr.mxu0 0.0
        %633 = vmatpush1.msra.mxu0 0.0
        %634 = vmatprep.subr.mxu0 0.0
        %635 = vmatpush1.msra.mxu0 0.0
        %636 = vmatprep.subr.mxu0 0.0
        %637 = vmatpush1.msra.mxu0 0.0
        %638 = vmatprep.subr.mxu0 0.0
        %639 = vmatpush1.msra.mxu0 0.0
        %640 = vmatprep.subr.mxu0 0.0
        %641 = vmatpush1.msra.mxu0 0.0
        %642 = vmatprep.subr.mxu0 0.0
        %643 = vmatpush1.msra.mxu0 0.0
        %v644 = vand.u32 %v274, 4294901760
        %v645 = vsub.f32 %v274, %v644
        %v646 = vand.u32 %v645, 4294901760
        %647 = vmatprep.subr.mxu0 %v646
        %v648 = vand.u32 %v273, 4294901760
        %v649 = vsub.f32 %v273, %v648
        %v650 = vand.u32 %v649, 4294901760
        %651 = vmatpush1.msra.mxu0 %v650
        %v652 = vand.u32 %v272, 4294901760
        %v653 = vsub.f32 %v272, %v652
        %v654 = vand.u32 %v653, 4294901760
        %655 = vmatprep.subr.mxu0 %v654
        %v656 = vand.u32 %v271, 4294901760
        %v657 = vsub.f32 %v271, %v656
        %v658 = vand.u32 %v657, 4294901760
        %659 = vmatpush1.msra.mxu0 %v658
        %660 = vmatprep.subr.mxu0 0.0
        %661 = vmatpush2.msra.mxu0 0.0
        %662 = vmatprep.subr.mxu0 0.0
        %663 = vmatpush2.msra.mxu0 0.0
        %664 = vmatprep.subr.mxu0 0.0
        %665 = vmatpush2.msra.mxu0 0.0
        %666 = vmatprep.subr.mxu0 0.0
        %667 = vmatpush2.msra.mxu0 0.0
        %668 = vmatprep.subr.mxu0 0.0
        %669 = vmatpush2.msra.mxu0 0.0
        %670 = vmatprep.subr.mxu0 0.0
        %671 = vmatpush2.msra.mxu0 0.0
        %672 = vmatprep.subr.mxu0 0.0
        %673 = vmatpush2.msra.mxu0 0.0
        %674 = vmatprep.subr.mxu0 0.0
        %675 = vmatpush2.msra.mxu0 0.0
        %676 = vmatprep.subr.mxu0 0.0
        %677 = vmatpush2.msra.mxu0 0.0
        %678 = vmatprep.subr.mxu0 0.0
        %679 = vmatpush2.msra.mxu0 0.0
        %680 = vmatprep.subr.mxu0 0.0
        %681 = vmatpush2.msra.mxu0 0.0
        %682 = vmatprep.subr.mxu0 0.0
        %683 = vmatpush2.msra.mxu0 0.0
        %684 = vmatprep.subr.mxu0 0.0
        %685 = vmatpush2.msra.mxu0 0.0
        %686 = vmatprep.subr.mxu0 0.0
        %687 = vmatpush2.msra.mxu0 0.0
        %688 = vmatprep.subr.mxu0 0.0
        %689 = vmatpush2.msra.mxu0 0.0
        %690 = vmatprep.subr.mxu0 0.0
        %691 = vmatpush2.msra.mxu0 0.0
        %692 = vmatprep.mubr.f32.mxu0 0.0
        %v693 = vand.u32 %v283, 4294901760
        %694 = vmatmul.mubr.f32.gmra.mxu0 %v693
        %v695 = vpop.f32.mrf.mxu0
        %v696 = vadd.f32 %v612, %v695
        %v697 = vpop.f32.mrf.mxu0
        %v698 = vadd.f32 %v614, %v697
        %699 = vdwg.mxu0
        %700 = vmatprep.subr.mxu0 0.0
        %701 = vmatpush1.msra.mxu0 0.0
        %702 = vmatprep.subr.mxu0 0.0
        %703 = vmatpush1.msra.mxu0 0.0
        %704 = vmatprep.subr.mxu0 0.0
        %705 = vmatpush1.msra.mxu0 0.0
        %706 = vmatprep.subr.mxu0 0.0
        %707 = vmatpush1.msra.mxu0 0.0
        %708 = vmatprep.subr.mxu0 0.0
        %709 = vmatpush1.msra.mxu0 0.0
        %710 = vmatprep.subr.mxu0 0.0
        %711 = vmatpush1.msra.mxu0 0.0
        %712 = vmatprep.subr.mxu0 0.0
        %713 = vmatpush1.msra.mxu0 0.0
        %714 = vmatprep.subr.mxu0 0.0
        %715 = vmatpush1.msra.mxu0 0.0
        %716 = vmatprep.subr.mxu0 0.0
        %717 = vmatpush1.msra.mxu0 0.0
        %718 = vmatprep.subr.mxu0 0.0
        %719 = vmatpush1.msra.mxu0 0.0
        %720 = vmatprep.subr.mxu0 0.0
        %721 = vmatpush1.msra.mxu0 0.0
        %722 = vmatprep.subr.mxu0 0.0
        %723 = vmatpush1.msra.mxu0 0.0
        %724 = vmatprep.subr.mxu0 0.0
        %725 = vmatpush1.msra.mxu0 0.0
        %726 = vmatprep.subr.mxu0 0.0
        %727 = vmatpush1.msra.mxu0 0.0
        %v728 = vand.u32 %v274, 4294901760
        %729 = vmatprep.subr.mxu0 %v728
        %v730 = vand.u32 %v273, 4294901760
        %731 = vmatpush1.msra.mxu0 %v730
        %v732 = vand.u32 %v272, 4294901760
        %733 = vmatprep.subr.mxu0 %v732
        %v734 = vand.u32 %v271, 4294901760
        %735 = vmatpush1.msra.mxu0 %v734
        %736 = vmatprep.subr.mxu0 0.0
        %737 = vmatpush2.msra.mxu0 0.0
        %738 = vmatprep.subr.mxu0 0.0
        %739 = vmatpush2.msra.mxu0 0.0
        %740 = vmatprep.subr.mxu0 0.0
        %741 = vmatpush2.msra.mxu0 0.0
        %742 = vmatprep.subr.mxu0 0.0
        %743 = vmatpush2.msra.mxu0 0.0
        %744 = vmatprep.subr.mxu0 0.0
        %745 = vmatpush2.msra.mxu0 0.0
        %746 = vmatprep.subr.mxu0 0.0
        %747 = vmatpush2.msra.mxu0 0.0
        %748 = vmatprep.subr.mxu0 0.0
        %749 = vmatpush2.msra.mxu0 0.0
        %750 = vmatprep.subr.mxu0 0.0
        %751 = vmatpush2.msra.mxu0 0.0
        %752 = vmatprep.subr.mxu0 0.0
        %753 = vmatpush2.msra.mxu0 0.0
        %754 = vmatprep.subr.mxu0 0.0
        %755 = vmatpush2.msra.mxu0 0.0
        %756 = vmatprep.subr.mxu0 0.0
        %757 = vmatpush2.msra.mxu0 0.0
        %758 = vmatprep.subr.mxu0 0.0
        %759 = vmatpush2.msra.mxu0 0.0
        %760 = vmatprep.subr.mxu0 0.0
        %761 = vmatpush2.msra.mxu0 0.0
        %762 = vmatprep.subr.mxu0 0.0
        %763 = vmatpush2.msra.mxu0 0.0
        %764 = vmatprep.subr.mxu0 0.0
        %765 = vmatpush2.msra.mxu0 0.0
        %766 = vmatprep.subr.mxu0 0.0
        %767 = vmatpush2.msra.mxu0 0.0
        %768 = vmatprep.mubr.f32.mxu0 0.0
        %v769 = vand.u32 %v283, 4294901760
        %770 = vmatmul.mubr.f32.gmra.mxu0 %v769
        %v771 = vpop.f32.mrf.mxu0
        %v772 = vadd.f32 %v696, %v771
        %v773 = vpop.f32.mrf.mxu0
        %v774 = vadd.f32 %v698, %v773
        %775 = vdwg.mxu0
        %v776 = vmax.f32 %v772, 0.0
        %v777 = vmax.f32 %v774, 0.0
        %v778 = vlaneseq
        %v779 = vand.u32 %v778, 127
        %v780 = vadd.s32 %v779, 128
        %vm781 = vcmp.ge.s32.totalorder %v779, 16
        %vm782 = vcmp.ge.s32.totalorder %v780, 16
        %783 = vrot.lane.b32.xlu0 %v776, 16
        %v784 = vpop.permute.xlu0 %783
        %785 = vrot.lane.b32.xlu0 %v777, 16
        %v786 = vpop.permute.xlu0 %785
        %vm787 = vcmp.lt.s32.totalorder %v779, 16
        %v788 = vsel %vm787, %v784, %v786
        %v789 = vsel %vm787, %v786, %v784
        %v790 = vsel %vm781, 1, 0
        %v791 = vsel %vm782, 1, 0
        %vm792 = vcmp.eq.s32.totalorder %v790, 1
        %vm793 = vcmp.eq.s32.totalorder %v791, 1
        %v794 = vsel %vm792, %v789, 0.0
        %v795 = vsel %vm793, %v788, 0.0
        %vm796 = vcmp.lt.s32.totalorder %v779, 240
        %vm797 = vcmp.lt.s32.totalorder %v780, 240
        %798 = vrot.lane.b32.xlu0 %v776, 112
        %v799 = vpop.permute.xlu0 %798
        %800 = vrot.lane.b32.xlu0 %v777, 112
        %v801 = vpop.permute.xlu0 %800
        %vm802 = vcmp.lt.s32.totalorder %v779, 112
        %v803 = vsel %vm802, %v799, %v801
        %v804 = vsel %vm802, %v801, %v799
        %v805 = vsel %vm796, 1, 0
        %v806 = vsel %vm797, 1, 0
        %vm807 = vcmp.eq.s32.totalorder %v805, 1
        %vm808 = vcmp.eq.s32.totalorder %v806, 1
        %v809 = vsel %vm807, %v803, 0.0
        %v810 = vsel %vm808, %v804, 0.0
        %v813 = vrot.slane %v776, 4
        %v814 = vrot.slane %v777, 4
        %vm817 = vcmask 1043456
        %v818 = vsel %vm817, %v794, %v813
        %v819 = vsel %vm817, %v795, %v814
        %v820 = vld [vmem:[%s2] sm:$0xff]
        %v821 = vld [vmem:[%s2 + $0x8] sm:$0xf]
        %vm822 = vcmask 97280
        %v824 = vsel %vm822, %v820, 0
        %v827 = vsel %vm822, %v821, 0
        %v830 = vsel %vm817, %v809, 0
        %v833 = vsel %vm817, %v810, 0
        %835 = vmatprep.subr.mxu0 0.0
        %836 = vmatpush1.msra.mxu0 0.0
        %837 = vmatprep.subr.mxu0 0.0
        %838 = vmatpush1.msra.mxu0 0.0
        %839 = vmatprep.subr.mxu0 0.0
        %840 = vmatpush1.msra.mxu0 0.0
        %841 = vmatprep.subr.mxu0 0.0
        %842 = vmatpush1.msra.mxu0 0.0
        %843 = vmatprep.subr.mxu0 0.0
        %844 = vmatpush1.msra.mxu0 0.0
        %845 = vmatprep.subr.mxu0 0.0
        %846 = vmatpush1.msra.mxu0 0.0
        %847 = vmatprep.subr.mxu0 0.0
        %848 = vmatpush1.msra.mxu0 0.0
        %849 = vmatprep.subr.mxu0 0.0
        %850 = vmatpush1.msra.mxu0 0.0
        %851 = vmatprep.subr.mxu0 0.0
        %852 = vmatpush1.msra.mxu0 0.0
        %853 = vmatprep.subr.mxu0 0.0
        %854 = vmatpush1.msra.mxu0 0.0
        %855 = vmatprep.subr.mxu0 0.0
        %856 = vmatpush1.msra.mxu0 0.0
        %857 = vmatprep.subr.mxu0 0.0
        %858 = vmatpush1.msra.mxu0 0.0
        %859 = vmatprep.subr.mxu0 0.0
        %860 = vmatpush1.msra.mxu0 0.0
        %861 = vmatprep.subr.mxu0 0.0
        %862 = vmatpush1.msra.mxu0 0.0
        %v863 = vand.u32 %v833, 4294901760
        %864 = vmatprep.subr.mxu0 %v863
        %v865 = vand.u32 %v830, 4294901760
        %866 = vmatpush1.msra.mxu0 %v865
        %v867 = vand.u32 %v819, 4294901760
        %868 = vmatprep.subr.mxu0 %v867
        %v869 = vand.u32 %v818, 4294901760
        %870 = vmatpush1.msra.mxu0 %v869
        %871 = vmatprep.subr.mxu0 0.0
        %872 = vmatpush2.msra.mxu0 0.0
        %873 = vmatprep.subr.mxu0 0.0
        %874 = vmatpush2.msra.mxu0 0.0
        %875 = vmatprep.subr.mxu0 0.0
        %876 = vmatpush2.msra.mxu0 0.0
        %877 = vmatprep.subr.mxu0 0.0
        %878 = vmatpush2.msra.mxu0 0.0
        %879 = vmatprep.subr.mxu0 0.0
        %880 = vmatpush2.msra.mxu0 0.0
        %881 = vmatprep.subr.mxu0 0.0
        %882 = vmatpush2.msra.mxu0 0.0
        %883 = vmatprep.subr.mxu0 0.0
        %884 = vmatpush2.msra.mxu0 0.0
        %885 = vmatprep.subr.mxu0 0.0
        %886 = vmatpush2.msra.mxu0 0.0
        %887 = vmatprep.subr.mxu0 0.0
        %888 = vmatpush2.msra.mxu0 0.0
        %889 = vmatprep.subr.mxu0 0.0
        %890 = vmatpush2.msra.mxu0 0.0
        %891 = vmatprep.subr.mxu0 0.0
        %892 = vmatpush2.msra.mxu0 0.0
        %893 = vmatprep.subr.mxu0 0.0
        %894 = vmatpush2.msra.mxu0 0.0
        %895 = vmatprep.subr.mxu0 0.0
        %896 = vmatpush2.msra.mxu0 0.0
        %897 = vmatprep.subr.mxu0 0.0
        %898 = vmatpush2.msra.mxu0 0.0
        %899 = vmatprep.subr.mxu0 0.0
        %900 = vmatpush2.msra.mxu0 0.0
        %901 = vmatprep.subr.mxu0 0.0
        %902 = vmatpush2.msra.mxu0 0.0
        %903 = vmatprep.mubr.f32.mxu0 0.0
        %v904 = vand.u32 %v824, 4294901760
        %v905 = vsub.f32 %v824, %v904
        %v906 = vand.u32 %v905, 4294901760
        %v907 = vsub.f32 %v905, %v906
        %v908 = vand.u32 %v907, 4294901760
        %909 = vmatmul.mubr.f32.gmra.mxu0 %v908
        %v910 = vpop.f32.mrf.mxu0
        %v911 = vadd.f32 0.0, %v910
        %v912 = vpop.f32.mrf.mxu0
        %v913 = vadd.f32 0.0, %v912
        %914 = vmatprep.mubr.f32.mxu0 0.0
        %v915 = vand.u32 %v827, 4294901760
        %v916 = vsub.f32 %v827, %v915
        %v917 = vand.u32 %v916, 4294901760
        %v918 = vsub.f32 %v916, %v917
        %v919 = vand.u32 %v918, 4294901760
        %920 = vmatmul.mubr.f32.gmra.mxu0 %v919
        %v921 = vpop.f32.mrf.mxu0
        %v922 = vadd.f32 0.0, %v921
        %v923 = vpop.f32.mrf.mxu0
        %v924 = vadd.f32 0.0, %v923
        %925 = vdwg.mxu0
        %926 = vmatprep.subr.mxu0 0.0
        %927 = vmatpush1.msra.mxu0 0.0
        %928 = vmatprep.subr.mxu0 0.0
        %929 = vmatpush1.msra.mxu0 0.0
        %930 = vmatprep.subr.mxu0 0.0
        %931 = vmatpush1.msra.mxu0 0.0
        %932 = vmatprep.subr.mxu0 0.0
        %933 = vmatpush1.msra.mxu0 0.0
        %934 = vmatprep.subr.mxu0 0.0
        %935 = vmatpush1.msra.mxu0 0.0
        %936 = vmatprep.subr.mxu0 0.0
        %937 = vmatpush1.msra.mxu0 0.0
        %938 = vmatprep.subr.mxu0 0.0
        %939 = vmatpush1.msra.mxu0 0.0
        %940 = vmatprep.subr.mxu0 0.0
        %941 = vmatpush1.msra.mxu0 0.0
        %942 = vmatprep.subr.mxu0 0.0
        %943 = vmatpush1.msra.mxu0 0.0
        %944 = vmatprep.subr.mxu0 0.0
        %945 = vmatpush1.msra.mxu0 0.0
        %946 = vmatprep.subr.mxu0 0.0
        %947 = vmatpush1.msra.mxu0 0.0
        %948 = vmatprep.subr.mxu0 0.0
        %949 = vmatpush1.msra.mxu0 0.0
        %950 = vmatprep.subr.mxu0 0.0
        %951 = vmatpush1.msra.mxu0 0.0
        %952 = vmatprep.subr.mxu0 0.0
        %953 = vmatpush1.msra.mxu0 0.0
        %v954 = vand.u32 %v833, 4294901760
        %v955 = vsub.f32 %v833, %v954
        %v956 = vand.u32 %v955, 4294901760
        %v957 = vsub.f32 %v955, %v956
        %v958 = vand.u32 %v957, 4294901760
        %959 = vmatprep.subr.mxu0 %v958
        %v960 = vand.u32 %v830, 4294901760
        %v961 = vsub.f32 %v830, %v960
        %v962 = vand.u32 %v961, 4294901760
        %v963 = vsub.f32 %v961, %v962
        %v964 = vand.u32 %v963, 4294901760
        %965 = vmatpush1.msra.mxu0 %v964
        %v966 = vand.u32 %v819, 4294901760
        %v967 = vsub.f32 %v819, %v966
        %v968 = vand.u32 %v967, 4294901760
        %v969 = vsub.f32 %v967, %v968
        %v970 = vand.u32 %v969, 4294901760
        %971 = vmatprep.subr.mxu0 %v970
        %v972 = vand.u32 %v818, 4294901760
        %v973 = vsub.f32 %v818, %v972
        %v974 = vand.u32 %v973, 4294901760
        %v975 = vsub.f32 %v973, %v974
        %v976 = vand.u32 %v975, 4294901760
        %977 = vmatpush1.msra.mxu0 %v976
        %978 = vmatprep.subr.mxu0 0.0
        %979 = vmatpush2.msra.mxu0 0.0
        %980 = vmatprep.subr.mxu0 0.0
        %981 = vmatpush2.msra.mxu0 0.0
        %982 = vmatprep.subr.mxu0 0.0
        %983 = vmatpush2.msra.mxu0 0.0
        %984 = vmatprep.subr.mxu0 0.0
        %985 = vmatpush2.msra.mxu0 0.0
        %986 = vmatprep.subr.mxu0 0.0
        %987 = vmatpush2.msra.mxu0 0.0
        %988 = vmatprep.subr.mxu0 0.0
        %989 = vmatpush2.msra.mxu0 0.0
        %990 = vmatprep.subr.mxu0 0.0
        %991 = vmatpush2.msra.mxu0 0.0
        %992 = vmatprep.subr.mxu0 0.0
        %993 = vmatpush2.msra.mxu0 0.0
        %994 = vmatprep.subr.mxu0 0.0
        %995 = vmatpush2.msra.mxu0 0.0
        %996 = vmatprep.subr.mxu0 0.0
        %997 = vmatpush2.msra.mxu0 0.0
        %998 = vmatprep.subr.mxu0 0.0
        %999 = vmatpush2.msra.mxu0 0.0
        %1000 = vmatprep.subr.mxu0 0.0
        %1001 = vmatpush2.msra.mxu0 0.0
        %1002 = vmatprep.subr.mxu0 0.0
        %1003 = vmatpush2.msra.mxu0 0.0
        %1004 = vmatprep.subr.mxu0 0.0
        %1005 = vmatpush2.msra.mxu0 0.0
        %1006 = vmatprep.subr.mxu0 0.0
        %1007 = vmatpush2.msra.mxu0 0.0
        %1008 = vmatprep.subr.mxu0 0.0
        %1009 = vmatpush2.msra.mxu0 0.0
        %1010 = vmatprep.mubr.f32.mxu0 0.0
        %v1011 = vand.u32 %v824, 4294901760
        %1012 = vmatmul.mubr.f32.gmra.mxu0 %v1011
        %v1013 = vpop.f32.mrf.mxu0
        %v1014 = vadd.f32 %v911, %v1013
        %v1015 = vpop.f32.mrf.mxu0
        %v1016 = vadd.f32 %v913, %v1015
        %1017 = vmatprep.mubr.f32.mxu0 0.0
        %v1018 = vand.u32 %v827, 4294901760
        %1019 = vmatmul.mubr.f32.gmra.mxu0 %v1018
        %v1020 = vpop.f32.mrf.mxu0
        %v1021 = vadd.f32 %v922, %v1020
        %v1022 = vpop.f32.mrf.mxu0
        %v1023 = vadd.f32 %v924, %v1022
        %1024 = vdwg.mxu0
        %1025 = vmatprep.subr.mxu0 0.0
        %1026 = vmatpush1.msra.mxu0 0.0
        %1027 = vmatprep.subr.mxu0 0.0
        %1028 = vmatpush1.msra.mxu0 0.0
        %1029 = vmatprep.subr.mxu0 0.0
        %1030 = vmatpush1.msra.mxu0 0.0
        %1031 = vmatprep.subr.mxu0 0.0
        %1032 = vmatpush1.msra.mxu0 0.0
        %1033 = vmatprep.subr.mxu0 0.0
        %1034 = vmatpush1.msra.mxu0 0.0
        %1035 = vmatprep.subr.mxu0 0.0
        %1036 = vmatpush1.msra.mxu0 0.0
        %1037 = vmatprep.subr.mxu0 0.0
        %1038 = vmatpush1.msra.mxu0 0.0
        %1039 = vmatprep.subr.mxu0 0.0
        %1040 = vmatpush1.msra.mxu0 0.0
        %1041 = vmatprep.subr.mxu0 0.0
        %1042 = vmatpush1.msra.mxu0 0.0
        %1043 = vmatprep.subr.mxu0 0.0
        %1044 = vmatpush1.msra.mxu0 0.0
        %1045 = vmatprep.subr.mxu0 0.0
        %1046 = vmatpush1.msra.mxu0 0.0
        %1047 = vmatprep.subr.mxu0 0.0
        %1048 = vmatpush1.msra.mxu0 0.0
        %1049 = vmatprep.subr.mxu0 0.0
        %1050 = vmatpush1.msra.mxu0 0.0
        %1051 = vmatprep.subr.mxu0 0.0
        %1052 = vmatpush1.msra.mxu0 0.0
        %v1053 = vand.u32 %v833, 4294901760
        %v1054 = vsub.f32 %v833, %v1053
        %1055 = vmatprep.subr.mxu0 %v1054
        %v1056 = vand.u32 %v830, 4294901760
        %v1057 = vsub.f32 %v830, %v1056
        %1058 = vmatpush1.msra.mxu0 %v1057
        %v1059 = vand.u32 %v819, 4294901760
        %v1060 = vsub.f32 %v819, %v1059
        %1061 = vmatprep.subr.mxu0 %v1060
        %v1062 = vand.u32 %v818, 4294901760
        %v1063 = vsub.f32 %v818, %v1062
        %1064 = vmatpush1.msra.mxu0 %v1063
        %1065 = vmatprep.subr.mxu0 0.0
        %1066 = vmatpush2.msra.mxu0 0.0
        %1067 = vmatprep.subr.mxu0 0.0
        %1068 = vmatpush2.msra.mxu0 0.0
        %1069 = vmatprep.subr.mxu0 0.0
        %1070 = vmatpush2.msra.mxu0 0.0
        %1071 = vmatprep.subr.mxu0 0.0
        %1072 = vmatpush2.msra.mxu0 0.0
        %1073 = vmatprep.subr.mxu0 0.0
        %1074 = vmatpush2.msra.mxu0 0.0
        %1075 = vmatprep.subr.mxu0 0.0
        %1076 = vmatpush2.msra.mxu0 0.0
        %1077 = vmatprep.subr.mxu0 0.0
        %1078 = vmatpush2.msra.mxu0 0.0
        %1079 = vmatprep.subr.mxu0 0.0
        %1080 = vmatpush2.msra.mxu0 0.0
        %1081 = vmatprep.subr.mxu0 0.0
        %1082 = vmatpush2.msra.mxu0 0.0
        %1083 = vmatprep.subr.mxu0 0.0
        %1084 = vmatpush2.msra.mxu0 0.0
        %1085 = vmatprep.subr.mxu0 0.0
        %1086 = vmatpush2.msra.mxu0 0.0
        %1087 = vmatprep.subr.mxu0 0.0
        %1088 = vmatpush2.msra.mxu0 0.0
        %1089 = vmatprep.subr.mxu0 0.0
        %1090 = vmatpush2.msra.mxu0 0.0
        %1091 = vmatprep.subr.mxu0 0.0
        %1092 = vmatpush2.msra.mxu0 0.0
        %1093 = vmatprep.subr.mxu0 0.0
        %1094 = vmatpush2.msra.mxu0 0.0
        %1095 = vmatprep.subr.mxu0 0.0
        %1096 = vmatpush2.msra.mxu0 0.0
        %1097 = vmatprep.mubr.f32.mxu0 0.0
        %v1098 = vand.u32 %v824, 4294901760
        %v1099 = vsub.f32 %v824, %v1098
        %1100 = vmatmul.mubr.f32.gmra.mxu0 %v1099
        %v1101 = vpop.f32.mrf.mxu0
        %v1102 = vadd.f32 %v1014, %v1101
        %v1103 = vpop.f32.mrf.mxu0
        %v1104 = vadd.f32 %v1016, %v1103
        %1105 = vmatprep.mubr.f32.mxu0 0.0
        %v1106 = vand.u32 %v827, 4294901760
        %v1107 = vsub.f32 %v827, %v1106
        %1108 = vmatmul.mubr.f32.gmra.mxu0 %v1107
        %v1109 = vpop.f32.mrf.mxu0
        %v1110 = vadd.f32 %v1021, %v1109
        %v1111 = vpop.f32.mrf.mxu0
        %v1112 = vadd.f32 %v1023, %v1111
        %1113 = vdwg.mxu0
        %1114 = vmatprep.subr.mxu0 0.0
        %1115 = vmatpush1.msra.mxu0 0.0
        %1116 = vmatprep.subr.mxu0 0.0
        %1117 = vmatpush1.msra.mxu0 0.0
        %1118 = vmatprep.subr.mxu0 0.0
        %1119 = vmatpush1.msra.mxu0 0.0
        %1120 = vmatprep.subr.mxu0 0.0
        %1121 = vmatpush1.msra.mxu0 0.0
        %1122 = vmatprep.subr.mxu0 0.0
        %1123 = vmatpush1.msra.mxu0 0.0
        %1124 = vmatprep.subr.mxu0 0.0
        %1125 = vmatpush1.msra.mxu0 0.0
        %1126 = vmatprep.subr.mxu0 0.0
        %1127 = vmatpush1.msra.mxu0 0.0
        %1128 = vmatprep.subr.mxu0 0.0
        %1129 = vmatpush1.msra.mxu0 0.0
        %1130 = vmatprep.subr.mxu0 0.0
        %1131 = vmatpush1.msra.mxu0 0.0
        %1132 = vmatprep.subr.mxu0 0.0
        %1133 = vmatpush1.msra.mxu0 0.0
        %1134 = vmatprep.subr.mxu0 0.0
        %1135 = vmatpush1.msra.mxu0 0.0
        %1136 = vmatprep.subr.mxu0 0.0
        %1137 = vmatpush1.msra.mxu0 0.0
        %1138 = vmatprep.subr.mxu0 0.0
        %1139 = vmatpush1.msra.mxu0 0.0
        %1140 = vmatprep.subr.mxu0 0.0
        %1141 = vmatpush1.msra.mxu0 0.0
        %v1142 = vand.u32 %v833, 4294901760
        %1143 = vmatprep.subr.mxu0 %v1142
        %v1144 = vand.u32 %v830, 4294901760
        %1145 = vmatpush1.msra.mxu0 %v1144
        %v1146 = vand.u32 %v819, 4294901760
        %1147 = vmatprep.subr.mxu0 %v1146
        %v1148 = vand.u32 %v818, 4294901760
        %1149 = vmatpush1.msra.mxu0 %v1148
        %1150 = vmatprep.subr.mxu0 0.0
        %1151 = vmatpush2.msra.mxu0 0.0
        %1152 = vmatprep.subr.mxu0 0.0
        %1153 = vmatpush2.msra.mxu0 0.0
        %1154 = vmatprep.subr.mxu0 0.0
        %1155 = vmatpush2.msra.mxu0 0.0
        %1156 = vmatprep.subr.mxu0 0.0
        %1157 = vmatpush2.msra.mxu0 0.0
        %1158 = vmatprep.subr.mxu0 0.0
        %1159 = vmatpush2.msra.mxu0 0.0
        %1160 = vmatprep.subr.mxu0 0.0
        %1161 = vmatpush2.msra.mxu0 0.0
        %1162 = vmatprep.subr.mxu0 0.0
        %1163 = vmatpush2.msra.mxu0 0.0
        %1164 = vmatprep.subr.mxu0 0.0
        %1165 = vmatpush2.msra.mxu0 0.0
        %1166 = vmatprep.subr.mxu0 0.0
        %1167 = vmatpush2.msra.mxu0 0.0
        %1168 = vmatprep.subr.mxu0 0.0
        %1169 = vmatpush2.msra.mxu0 0.0
        %1170 = vmatprep.subr.mxu0 0.0
        %1171 = vmatpush2.msra.mxu0 0.0
        %1172 = vmatprep.subr.mxu0 0.0
        %1173 = vmatpush2.msra.mxu0 0.0
        %1174 = vmatprep.subr.mxu0 0.0
        %1175 = vmatpush2.msra.mxu0 0.0
        %1176 = vmatprep.subr.mxu0 0.0
        %1177 = vmatpush2.msra.mxu0 0.0
        %1178 = vmatprep.subr.mxu0 0.0
        %1179 = vmatpush2.msra.mxu0 0.0
        %1180 = vmatprep.subr.mxu0 0.0
        %1181 = vmatpush2.msra.mxu0 0.0
        %1182 = vmatprep.mubr.f32.mxu0 0.0
        %v1183 = vand.u32 %v824, 4294901760
        %v1184 = vsub.f32 %v824, %v1183
        %v1185 = vand.u32 %v1184, 4294901760
        %1186 = vmatmul.mubr.f32.gmra.mxu0 %v1185
        %v1187 = vpop.f32.mrf.mxu0
        %v1188 = vadd.f32 %v1102, %v1187
        %v1189 = vpop.f32.mrf.mxu0
        %v1190 = vadd.f32 %v1104, %v1189
        %1191 = vmatprep.mubr.f32.mxu0 0.0
        %v1192 = vand.u32 %v827, 4294901760
        %v1193 = vsub.f32 %v827, %v1192
        %v1194 = vand.u32 %v1193, 4294901760
        %1195 = vmatmul.mubr.f32.gmra.mxu0 %v1194
        %v1196 = vpop.f32.mrf.mxu0
        %v1197 = vadd.f32 %v1110, %v1196
        %v1198 = vpop.f32.mrf.mxu0
        %v1199 = vadd.f32 %v1112, %v1198
        %1200 = vdwg.mxu0
        %1201 = vmatprep.subr.mxu0 0.0
        %1202 = vmatpush1.msra.mxu0 0.0
        %1203 = vmatprep.subr.mxu0 0.0
        %1204 = vmatpush1.msra.mxu0 0.0
        %1205 = vmatprep.subr.mxu0 0.0
        %1206 = vmatpush1.msra.mxu0 0.0
        %1207 = vmatprep.subr.mxu0 0.0
        %1208 = vmatpush1.msra.mxu0 0.0
        %1209 = vmatprep.subr.mxu0 0.0
        %1210 = vmatpush1.msra.mxu0 0.0
        %1211 = vmatprep.subr.mxu0 0.0
        %1212 = vmatpush1.msra.mxu0 0.0
        %1213 = vmatprep.subr.mxu0 0.0
        %1214 = vmatpush1.msra.mxu0 0.0
        %1215 = vmatprep.subr.mxu0 0.0
        %1216 = vmatpush1.msra.mxu0 0.0
        %1217 = vmatprep.subr.mxu0 0.0
        %1218 = vmatpush1.msra.mxu0 0.0
        %1219 = vmatprep.subr.mxu0 0.0
        %1220 = vmatpush1.msra.mxu0 0.0
        %1221 = vmatprep.subr.mxu0 0.0
        %1222 = vmatpush1.msra.mxu0 0.0
        %1223 = vmatprep.subr.mxu0 0.0
        %1224 = vmatpush1.msra.mxu0 0.0
        %1225 = vmatprep.subr.mxu0 0.0
        %1226 = vmatpush1.msra.mxu0 0.0
        %1227 = vmatprep.subr.mxu0 0.0
        %1228 = vmatpush1.msra.mxu0 0.0
        %v1229 = vand.u32 %v833, 4294901760
        %v1230 = vsub.f32 %v833, %v1229
        %v1231 = vand.u32 %v1230, 4294901760
        %1232 = vmatprep.subr.mxu0 %v1231
        %v1233 = vand.u32 %v830, 4294901760
        %v1234 = vsub.f32 %v830, %v1233
        %v1235 = vand.u32 %v1234, 4294901760
        %1236 = vmatpush1.msra.mxu0 %v1235
        %v1237 = vand.u32 %v819, 4294901760
        %v1238 = vsub.f32 %v819, %v1237
        %v1239 = vand.u32 %v1238, 4294901760
        %1240 = vmatprep.subr.mxu0 %v1239
        %v1241 = vand.u32 %v818, 4294901760
        %v1242 = vsub.f32 %v818, %v1241
        %v1243 = vand.u32 %v1242, 4294901760
        %1244 = vmatpush1.msra.mxu0 %v1243
        %1245 = vmatprep.subr.mxu0 0.0
        %1246 = vmatpush2.msra.mxu0 0.0
        %1247 = vmatprep.subr.mxu0 0.0
        %1248 = vmatpush2.msra.mxu0 0.0
        %1249 = vmatprep.subr.mxu0 0.0
        %1250 = vmatpush2.msra.mxu0 0.0
        %1251 = vmatprep.subr.mxu0 0.0
        %1252 = vmatpush2.msra.mxu0 0.0
        %1253 = vmatprep.subr.mxu0 0.0
        %1254 = vmatpush2.msra.mxu0 0.0
        %1255 = vmatprep.subr.mxu0 0.0
        %1256 = vmatpush2.msra.mxu0 0.0
        %1257 = vmatprep.subr.mxu0 0.0
        %1258 = vmatpush2.msra.mxu0 0.0
        %1259 = vmatprep.subr.mxu0 0.0
        %1260 = vmatpush2.msra.mxu0 0.0
        %1261 = vmatprep.subr.mxu0 0.0
        %1262 = vmatpush2.msra.mxu0 0.0
        %1263 = vmatprep.subr.mxu0 0.0
        %1264 = vmatpush2.msra.mxu0 0.0
        %1265 = vmatprep.subr.mxu0 0.0
        %1266 = vmatpush2.msra.mxu0 0.0
        %1267 = vmatprep.subr.mxu0 0.0
        %1268 = vmatpush2.msra.mxu0 0.0
        %1269 = vmatprep.subr.mxu0 0.0
        %1270 = vmatpush2.msra.mxu0 0.0
        %1271 = vmatprep.subr.mxu0 0.0
        %1272 = vmatpush2.msra.mxu0 0.0
        %1273 = vmatprep.subr.mxu0 0.0
        %1274 = vmatpush2.msra.mxu0 0.0
        %1275 = vmatprep.subr.mxu0 0.0
        %1276 = vmatpush2.msra.mxu0 0.0
        %1277 = vmatprep.mubr.f32.mxu0 0.0
        %v1278 = vand.u32 %v824, 4294901760
        %1279 = vmatmul.mubr.f32.gmra.mxu0 %v1278
        %v1280 = vpop.f32.mrf.mxu0
        %v1281 = vadd.f32 %v1188, %v1280
        %v1282 = vpop.f32.mrf.mxu0
        %v1283 = vadd.f32 %v1190, %v1282
        %1284 = vmatprep.mubr.f32.mxu0 0.0
        %v1285 = vand.u32 %v827, 4294901760
        %1286 = vmatmul.mubr.f32.gmra.mxu0 %v1285
        %v1287 = vpop.f32.mrf.mxu0
        %v1288 = vadd.f32 %v1197, %v1287
        %v1289 = vpop.f32.mrf.mxu0
        %v1290 = vadd.f32 %v1199, %v1289
        %1291 = vdwg.mxu0
        %1292 = vmatprep.subr.mxu0 0.0
        %1293 = vmatpush1.msra.mxu0 0.0
        %1294 = vmatprep.subr.mxu0 0.0
        %1295 = vmatpush1.msra.mxu0 0.0
        %1296 = vmatprep.subr.mxu0 0.0
        %1297 = vmatpush1.msra.mxu0 0.0
        %1298 = vmatprep.subr.mxu0 0.0
        %1299 = vmatpush1.msra.mxu0 0.0
        %1300 = vmatprep.subr.mxu0 0.0
        %1301 = vmatpush1.msra.mxu0 0.0
        %1302 = vmatprep.subr.mxu0 0.0
        %1303 = vmatpush1.msra.mxu0 0.0
        %1304 = vmatprep.subr.mxu0 0.0
        %1305 = vmatpush1.msra.mxu0 0.0
        %1306 = vmatprep.subr.mxu0 0.0
        %1307 = vmatpush1.msra.mxu0 0.0
        %1308 = vmatprep.subr.mxu0 0.0
        %1309 = vmatpush1.msra.mxu0 0.0
        %1310 = vmatprep.subr.mxu0 0.0
        %1311 = vmatpush1.msra.mxu0 0.0
        %1312 = vmatprep.subr.mxu0 0.0
        %1313 = vmatpush1.msra.mxu0 0.0
        %1314 = vmatprep.subr.mxu0 0.0
        %1315 = vmatpush1.msra.mxu0 0.0
        %1316 = vmatprep.subr.mxu0 0.0
        %1317 = vmatpush1.msra.mxu0 0.0
        %1318 = vmatprep.subr.mxu0 0.0
        %1319 = vmatpush1.msra.mxu0 0.0
        %v1320 = vand.u32 %v833, 4294901760
        %1321 = vmatprep.subr.mxu0 %v1320
        %v1322 = vand.u32 %v830, 4294901760
        %1323 = vmatpush1.msra.mxu0 %v1322
        %v1324 = vand.u32 %v819, 4294901760
        %1325 = vmatprep.subr.mxu0 %v1324
        %v1326 = vand.u32 %v818, 4294901760
        %1327 = vmatpush1.msra.mxu0 %v1326
        %1328 = vmatprep.subr.mxu0 0.0
        %1329 = vmatpush2.msra.mxu0 0.0
        %1330 = vmatprep.subr.mxu0 0.0
        %1331 = vmatpush2.msra.mxu0 0.0
        %1332 = vmatprep.subr.mxu0 0.0
        %1333 = vmatpush2.msra.mxu0 0.0
        %1334 = vmatprep.subr.mxu0 0.0
        %1335 = vmatpush2.msra.mxu0 0.0
        %1336 = vmatprep.subr.mxu0 0.0
        %1337 = vmatpush2.msra.mxu0 0.0
        %1338 = vmatprep.subr.mxu0 0.0
        %1339 = vmatpush2.msra.mxu0 0.0
        %1340 = vmatprep.subr.mxu0 0.0
        %1341 = vmatpush2.msra.mxu0 0.0
        %1342 = vmatprep.subr.mxu0 0.0
        %1343 = vmatpush2.msra.mxu0 0.0
        %1344 = vmatprep.subr.mxu0 0.0
        %1345 = vmatpush2.msra.mxu0 0.0
        %1346 = vmatprep.subr.mxu0 0.0
        %1347 = vmatpush2.msra.mxu0 0.0
        %1348 = vmatprep.subr.mxu0 0.0
        %1349 = vmatpush2.msra.mxu0 0.0
        %1350 = vmatprep.subr.mxu0 0.0
        %1351 = vmatpush2.msra.mxu0 0.0
        %1352 = vmatprep.subr.mxu0 0.0
        %1353 = vmatpush2.msra.mxu0 0.0
        %1354 = vmatprep.subr.mxu0 0.0
        %1355 = vmatpush2.msra.mxu0 0.0
        %1356 = vmatprep.subr.mxu0 0.0
        %1357 = vmatpush2.msra.mxu0 0.0
        %1358 = vmatprep.subr.mxu0 0.0
        %1359 = vmatpush2.msra.mxu0 0.0
        %1360 = vmatprep.mubr.f32.mxu0 0.0
        %v1361 = vand.u32 %v824, 4294901760
        %1362 = vmatmul.mubr.f32.gmra.mxu0 %v1361
        %v1363 = vpop.f32.mrf.mxu0
        %v1364 = vadd.f32 %v1281, %v1363
        %v1365 = vpop.f32.mrf.mxu0
        %v1366 = vadd.f32 %v1283, %v1365
        %1367 = vmatprep.mubr.f32.mxu0 0.0
        %v1368 = vand.u32 %v827, 4294901760
        %1369 = vmatmul.mubr.f32.gmra.mxu0 %v1368
        %v1370 = vpop.f32.mrf.mxu0
        %v1371 = vadd.f32 %v1288, %v1370
        %v1372 = vpop.f32.mrf.mxu0
        %v1373 = vadd.f32 %v1290, %v1372
        %1374 = vdwg.mxu0
        %1375 = vrot.lane.b32.xlu0 %v1364, 1
        %v1376 = vpop.permute.xlu0 %1375
        %1377 = vrot.lane.b32.xlu0 %v1366, 1
        %v1378 = vpop.permute.xlu0 %1377
        %vm1379 = vcmp.lt.s32.totalorder %v779, 1
        %v1380 = vsel %vm1379, %v1376, %v1378
        %v1381 = vsel %vm1379, %v1378, %v1376
        %v1382 = vld [vmem:[%s5] ss:$2 sm:$0x3]
        %v1384 = vlaneseq
        %v1385 = vshrl.u32 %v1384, 7
        %v1386 = vsub.s32 0, %v1385
        %v1387 = vrot.slane %v1382, %v1386
        %v1388 = vlaneseq
        %v1389 = vshrl.u32 %v1388, 7
        %v1390 = vsub.s32 1, %v1389
        %v1391 = vrot.slane %v1382, %v1390
        %v1394 = vmul.f32 %v1381, %v1387
        %v1395 = vmul.f32 %v1380, %v1391
        %v1398 = vrot.slane %v1394, 4
        %v1399 = vrot.slane %v1395, 4
        %v1402 = vadd.f32 %v1364, %v1398
        %v1403 = vadd.f32 %v1366, %v1399
        %1404 = vrot.lane.b32.xlu0 %v1371, 127
        %v1405 = vpop.permute.xlu0 %1404
        %1406 = vrot.lane.b32.xlu0 %v1373, 127
        %v1407 = vpop.permute.xlu0 %1406
        %vm1408 = vcmp.lt.s32.totalorder %v779, 127
        %v1409 = vsel %vm1408, %v1405, %v1407
        %v1410 = vsel %vm1408, %v1407, %v1405
        %s1411 = scalar_lea.vmem %s5, 1
        %v1412 = vld [vmem:[%s1411] ss:$2 sm:$0x3]
        %v1414 = vlaneseq
        %v1415 = vshrl.u32 %v1414, 7
        %v1416 = vsub.s32 0, %v1415
        %v1417 = vrot.slane %v1412, %v1416
        %v1418 = vlaneseq
        %v1419 = vshrl.u32 %v1418, 7
        %v1420 = vsub.s32 1, %v1419
        %v1421 = vrot.slane %v1412, %v1420
        %v1424 = vmul.f32 %v1409, %v1417
        %v1425 = vmul.f32 %v1410, %v1421
        %v1428 = vrot.slane %v1424, 4
        %v1429 = vrot.slane %v1425, 4
        %v1432 = vadd.f32 %v1402, %v1428
        %v1433 = vadd.f32 %v1403, %v1429
        %v1434 = vld [vmem:[%s4 + $0x4] sm:$0xf]
        %1436 = vset.pattern.permute.xlu0 0
        %1437 = vperm.xlu0 %1436, %v1434
        %v1438 = vpop.permute.xlu0 %1437
        %v1439 = vrot.slane %v1438, 4
        %v1441 = vadd.f32 %v1432, %v1439
        %v1442 = vadd.f32 %v1433, %v1439
        %v1443 = vmax.f32 %v1441, 0.0
        %v1444 = vmax.f32 %v1442, 0.0
        %v1445 = vld [vmem:[%s3] sm:$0xff]
        %v1446 = vld [vmem:[%s3 + $0x8] sm:$0xff]
        %v1447 = vld [vmem:[%s4 + $0x8] sm:$0xff]
        %v1448 = vld [vmem:[%s4 + $0x10] sm:$0xff]
        %1450 = vset.pattern.permute.xlu0 0
        %1451 = vperm.xlu0 %1450, %v1447
        %v1452 = vpop.permute.xlu0 %1451
        %1455 = vset.pattern.permute.xlu0 0
        %1456 = vperm.xlu0 %1455, %v1448
        %v1457 = vpop.permute.xlu0 %1456
        %v1461 = vrot.slane %v1443, 4
        %v1462 = vrot.slane %v1444, 4
        %vm1463 = vcmask 31744
        %v1465 = vsel %vm1463, %v1445, 0
        %v1468 = vsel %vm1463, %v1446, 0
        %v1470 = vsel %vm817, %v1461, 0
        %v1472 = vsel %vm817, %v1462, 0
        %1474 = vmatprep.subr.mxu0 0.0
        %1475 = vmatpush1.msra.mxu0 0.0
        %1476 = vmatprep.subr.mxu0 0.0
        %1477 = vmatpush1.msra.mxu0 0.0
        %1478 = vmatprep.subr.mxu0 0.0
        %1479 = vmatpush1.msra.mxu0 0.0
        %1480 = vmatprep.subr.mxu0 0.0
        %1481 = vmatpush1.msra.mxu0 0.0
        %1482 = vmatprep.subr.mxu0 0.0
        %1483 = vmatpush1.msra.mxu0 0.0
        %1484 = vmatprep.subr.mxu0 0.0
        %1485 = vmatpush1.msra.mxu0 0.0
        %1486 = vmatprep.subr.mxu0 0.0
        %1487 = vmatpush1.msra.mxu0 0.0
        %1488 = vmatprep.subr.mxu0 0.0
        %1489 = vmatpush1.msra.mxu0 0.0
        %1490 = vmatprep.subr.mxu0 0.0
        %1491 = vmatpush1.msra.mxu0 0.0
        %1492 = vmatprep.subr.mxu0 0.0
        %1493 = vmatpush1.msra.mxu0 0.0
        %1494 = vmatprep.subr.mxu0 0.0
        %1495 = vmatpush1.msra.mxu0 0.0
        %1496 = vmatprep.subr.mxu0 0.0
        %1497 = vmatpush1.msra.mxu0 0.0
        %1498 = vmatprep.subr.mxu0 0.0
        %1499 = vmatpush1.msra.mxu0 0.0
        %1500 = vmatprep.subr.mxu0 0.0
        %1501 = vmatpush1.msra.mxu0 0.0
        %1502 = vmatprep.subr.mxu0 0.0
        %1503 = vmatpush1.msra.mxu0 0.0
        %v1504 = vand.u32 %v1472, 4294901760
        %1505 = vmatprep.subr.mxu0 %v1504
        %v1506 = vand.u32 %v1470, 4294901760
        %1507 = vmatpush1.msra.mxu0 %v1506
        %1508 = vmatprep.subr.mxu0 0.0
        %1509 = vmatpush2.msra.mxu0 0.0
        %1510 = vmatprep.subr.mxu0 0.0
        %1511 = vmatpush2.msra.mxu0 0.0
        %1512 = vmatprep.subr.mxu0 0.0
        %1513 = vmatpush2.msra.mxu0 0.0
        %1514 = vmatprep.subr.mxu0 0.0
        %1515 = vmatpush2.msra.mxu0 0.0
        %1516 = vmatprep.subr.mxu0 0.0
        %1517 = vmatpush2.msra.mxu0 0.0
        %1518 = vmatprep.subr.mxu0 0.0
        %1519 = vmatpush2.msra.mxu0 0.0
        %1520 = vmatprep.subr.mxu0 0.0
        %1521 = vmatpush2.msra.mxu0 0.0
        %1522 = vmatprep.subr.mxu0 0.0
        %1523 = vmatpush2.msra.mxu0 0.0
        %1524 = vmatprep.subr.mxu0 0.0
        %1525 = vmatpush2.msra.mxu0 0.0
        %1526 = vmatprep.subr.mxu0 0.0
        %1527 = vmatpush2.msra.mxu0 0.0
        %1528 = vmatprep.subr.mxu0 0.0
        %1529 = vmatpush2.msra.mxu0 0.0
        %1530 = vmatprep.subr.mxu0 0.0
        %1531 = vmatpush2.msra.mxu0 0.0
        %1532 = vmatprep.subr.mxu0 0.0
        %1533 = vmatpush2.msra.mxu0 0.0
        %1534 = vmatprep.subr.mxu0 0.0
        %1535 = vmatpush2.msra.mxu0 0.0
        %1536 = vmatprep.subr.mxu0 0.0
        %1537 = vmatpush2.msra.mxu0 0.0
        %1538 = vmatprep.subr.mxu0 0.0
        %1539 = vmatpush2.msra.mxu0 0.0
        %1540 = vmatprep.mubr.f32.mxu0 0.0
        %v1541 = vand.u32 %v1465, 4294901760
        %v1542 = vsub.f32 %v1465, %v1541
        %v1543 = vand.u32 %v1542, 4294901760
        %v1544 = vsub.f32 %v1542, %v1543
        %v1545 = vand.u32 %v1544, 4294901760
        %1546 = vmatmul.mubr.f32.gmra.mxu0 %v1545
        %v1547 = vpop.f32.mrf.mxu0
        %v1548 = vadd.f32 %v1452, %v1547
        %v1549 = vpop.f32.mrf.mxu0
        %v1550 = vadd.f32 %v1452, %v1549
        %1551 = vmatprep.mubr.f32.mxu0 0.0
        %v1552 = vand.u32 %v1468, 4294901760
        %v1553 = vsub.f32 %v1468, %v1552
        %v1554 = vand.u32 %v1553, 4294901760
        %v1555 = vsub.f32 %v1553, %v1554
        %v1556 = vand.u32 %v1555, 4294901760
        %1557 = vmatmul.mubr.f32.gmra.mxu0 %v1556
        %v1558 = vpop.f32.mrf.mxu0
        %v1559 = vadd.f32 %v1457, %v1558
        %v1560 = vpop.f32.mrf.mxu0
        %v1561 = vadd.f32 %v1457, %v1560
        %1562 = vdwg.mxu0
        %1563 = vmatprep.subr.mxu0 0.0
        %1564 = vmatpush1.msra.mxu0 0.0
        %1565 = vmatprep.subr.mxu0 0.0
        %1566 = vmatpush1.msra.mxu0 0.0
        %1567 = vmatprep.subr.mxu0 0.0
        %1568 = vmatpush1.msra.mxu0 0.0
        %1569 = vmatprep.subr.mxu0 0.0
        %1570 = vmatpush1.msra.mxu0 0.0
        %1571 = vmatprep.subr.mxu0 0.0
        %1572 = vmatpush1.msra.mxu0 0.0
        %1573 = vmatprep.subr.mxu0 0.0
        %1574 = vmatpush1.msra.mxu0 0.0
        %1575 = vmatprep.subr.mxu0 0.0
        %1576 = vmatpush1.msra.mxu0 0.0
        %1577 = vmatprep.subr.mxu0 0.0
        %1578 = vmatpush1.msra.mxu0 0.0
        %1579 = vmatprep.subr.mxu0 0.0
        %1580 = vmatpush1.msra.mxu0 0.0
        %1581 = vmatprep.subr.mxu0 0.0
        %1582 = vmatpush1.msra.mxu0 0.0
        %1583 = vmatprep.subr.mxu0 0.0
        %1584 = vmatpush1.msra.mxu0 0.0
        %1585 = vmatprep.subr.mxu0 0.0
        %1586 = vmatpush1.msra.mxu0 0.0
        %1587 = vmatprep.subr.mxu0 0.0
        %1588 = vmatpush1.msra.mxu0 0.0
        %1589 = vmatprep.subr.mxu0 0.0
        %1590 = vmatpush1.msra.mxu0 0.0
        %1591 = vmatprep.subr.mxu0 0.0
        %1592 = vmatpush1.msra.mxu0 0.0
        %v1593 = vand.u32 %v1472, 4294901760
        %v1594 = vsub.f32 %v1472, %v1593
        %v1595 = vand.u32 %v1594, 4294901760
        %v1596 = vsub.f32 %v1594, %v1595
        %v1597 = vand.u32 %v1596, 4294901760
        %1598 = vmatprep.subr.mxu0 %v1597
        %v1599 = vand.u32 %v1470, 4294901760
        %v1600 = vsub.f32 %v1470, %v1599
        %v1601 = vand.u32 %v1600, 4294901760
        %v1602 = vsub.f32 %v1600, %v1601
        %v1603 = vand.u32 %v1602, 4294901760
        %1604 = vmatpush1.msra.mxu0 %v1603
        %1605 = vmatprep.subr.mxu0 0.0
        %1606 = vmatpush2.msra.mxu0 0.0
        %1607 = vmatprep.subr.mxu0 0.0
        %1608 = vmatpush2.msra.mxu0 0.0
        %1609 = vmatprep.subr.mxu0 0.0
        %1610 = vmatpush2.msra.mxu0 0.0
        %1611 = vmatprep.subr.mxu0 0.0
        %1612 = vmatpush2.msra.mxu0 0.0
        %1613 = vmatprep.subr.mxu0 0.0
        %1614 = vmatpush2.msra.mxu0 0.0
        %1615 = vmatprep.subr.mxu0 0.0
        %1616 = vmatpush2.msra.mxu0 0.0
        %1617 = vmatprep.subr.mxu0 0.0
        %1618 = vmatpush2.msra.mxu0 0.0
        %1619 = vmatprep.subr.mxu0 0.0
        %1620 = vmatpush2.msra.mxu0 0.0
        %1621 = vmatprep.subr.mxu0 0.0
        %1622 = vmatpush2.msra.mxu0 0.0
        %1623 = vmatprep.subr.mxu0 0.0
        %1624 = vmatpush2.msra.mxu0 0.0
        %1625 = vmatprep.subr.mxu0 0.0
        %1626 = vmatpush2.msra.mxu0 0.0
        %1627 = vmatprep.subr.mxu0 0.0
        %1628 = vmatpush2.msra.mxu0 0.0
        %1629 = vmatprep.subr.mxu0 0.0
        %1630 = vmatpush2.msra.mxu0 0.0
        %1631 = vmatprep.subr.mxu0 0.0
        %1632 = vmatpush2.msra.mxu0 0.0
        %1633 = vmatprep.subr.mxu0 0.0
        %1634 = vmatpush2.msra.mxu0 0.0
        %1635 = vmatprep.subr.mxu0 0.0
        %1636 = vmatpush2.msra.mxu0 0.0
        %1637 = vmatprep.mubr.f32.mxu0 0.0
        %v1638 = vand.u32 %v1465, 4294901760
        %1639 = vmatmul.mubr.f32.gmra.mxu0 %v1638
        %v1640 = vpop.f32.mrf.mxu0
        %v1641 = vadd.f32 %v1548, %v1640
        %v1642 = vpop.f32.mrf.mxu0
        %v1643 = vadd.f32 %v1550, %v1642
        %1644 = vmatprep.mubr.f32.mxu0 0.0
        %v1645 = vand.u32 %v1468, 4294901760
        %1646 = vmatmul.mubr.f32.gmra.mxu0 %v1645
        %v1647 = vpop.f32.mrf.mxu0
        %v1648 = vadd.f32 %v1559, %v1647
        %v1649 = vpop.f32.mrf.mxu0
        %v1650 = vadd.f32 %v1561, %v1649
        %1651 = vdwg.mxu0
        %1652 = vmatprep.subr.mxu0 0.0
        %1653 = vmatpush1.msra.mxu0 0.0
        %1654 = vmatprep.subr.mxu0 0.0
        %1655 = vmatpush1.msra.mxu0 0.0
        %1656 = vmatprep.subr.mxu0 0.0
        %1657 = vmatpush1.msra.mxu0 0.0
        %1658 = vmatprep.subr.mxu0 0.0
        %1659 = vmatpush1.msra.mxu0 0.0
        %1660 = vmatprep.subr.mxu0 0.0
        %1661 = vmatpush1.msra.mxu0 0.0
        %1662 = vmatprep.subr.mxu0 0.0
        %1663 = vmatpush1.msra.mxu0 0.0
        %1664 = vmatprep.subr.mxu0 0.0
        %1665 = vmatpush1.msra.mxu0 0.0
        %1666 = vmatprep.subr.mxu0 0.0
        %1667 = vmatpush1.msra.mxu0 0.0
        %1668 = vmatprep.subr.mxu0 0.0
        %1669 = vmatpush1.msra.mxu0 0.0
        %1670 = vmatprep.subr.mxu0 0.0
        %1671 = vmatpush1.msra.mxu0 0.0
        %1672 = vmatprep.subr.mxu0 0.0
        %1673 = vmatpush1.msra.mxu0 0.0
        %1674 = vmatprep.subr.mxu0 0.0
        %1675 = vmatpush1.msra.mxu0 0.0
        %1676 = vmatprep.subr.mxu0 0.0
        %1677 = vmatpush1.msra.mxu0 0.0
        %1678 = vmatprep.subr.mxu0 0.0
        %1679 = vmatpush1.msra.mxu0 0.0
        %1680 = vmatprep.subr.mxu0 0.0
        %1681 = vmatpush1.msra.mxu0 0.0
        %v1682 = vand.u32 %v1472, 4294901760
        %v1683 = vsub.f32 %v1472, %v1682
        %1684 = vmatprep.subr.mxu0 %v1683
        %v1685 = vand.u32 %v1470, 4294901760
        %v1686 = vsub.f32 %v1470, %v1685
        %1687 = vmatpush1.msra.mxu0 %v1686
        %1688 = vmatprep.subr.mxu0 0.0
        %1689 = vmatpush2.msra.mxu0 0.0
        %1690 = vmatprep.subr.mxu0 0.0
        %1691 = vmatpush2.msra.mxu0 0.0
        %1692 = vmatprep.subr.mxu0 0.0
        %1693 = vmatpush2.msra.mxu0 0.0
        %1694 = vmatprep.subr.mxu0 0.0
        %1695 = vmatpush2.msra.mxu0 0.0
        %1696 = vmatprep.subr.mxu0 0.0
        %1697 = vmatpush2.msra.mxu0 0.0
        %1698 = vmatprep.subr.mxu0 0.0
        %1699 = vmatpush2.msra.mxu0 0.0
        %1700 = vmatprep.subr.mxu0 0.0
        %1701 = vmatpush2.msra.mxu0 0.0
        %1702 = vmatprep.subr.mxu0 0.0
        %1703 = vmatpush2.msra.mxu0 0.0
        %1704 = vmatprep.subr.mxu0 0.0
        %1705 = vmatpush2.msra.mxu0 0.0
        %1706 = vmatprep.subr.mxu0 0.0
        %1707 = vmatpush2.msra.mxu0 0.0
        %1708 = vmatprep.subr.mxu0 0.0
        %1709 = vmatpush2.msra.mxu0 0.0
        %1710 = vmatprep.subr.mxu0 0.0
        %1711 = vmatpush2.msra.mxu0 0.0
        %1712 = vmatprep.subr.mxu0 0.0
        %1713 = vmatpush2.msra.mxu0 0.0
        %1714 = vmatprep.subr.mxu0 0.0
        %1715 = vmatpush2.msra.mxu0 0.0
        %1716 = vmatprep.subr.mxu0 0.0
        %1717 = vmatpush2.msra.mxu0 0.0
        %1718 = vmatprep.subr.mxu0 0.0
        %1719 = vmatpush2.msra.mxu0 0.0
        %1720 = vmatprep.mubr.f32.mxu0 0.0
        %v1721 = vand.u32 %v1465, 4294901760
        %v1722 = vsub.f32 %v1465, %v1721
        %1723 = vmatmul.mubr.f32.gmra.mxu0 %v1722
        %v1724 = vpop.f32.mrf.mxu0
        %v1725 = vadd.f32 %v1641, %v1724
        %v1726 = vpop.f32.mrf.mxu0
        %v1727 = vadd.f32 %v1643, %v1726
        %1728 = vmatprep.mubr.f32.mxu0 0.0
        %v1729 = vand.u32 %v1468, 4294901760
        %v1730 = vsub.f32 %v1468, %v1729
        %1731 = vmatmul.mubr.f32.gmra.mxu0 %v1730
        %v1732 = vpop.f32.mrf.mxu0
        %v1733 = vadd.f32 %v1648, %v1732
        %v1734 = vpop.f32.mrf.mxu0
        %v1735 = vadd.f32 %v1650, %v1734
        %1736 = vdwg.mxu0
        %1737 = vmatprep.subr.mxu0 0.0
        %1738 = vmatpush1.msra.mxu0 0.0
        %1739 = vmatprep.subr.mxu0 0.0
        %1740 = vmatpush1.msra.mxu0 0.0
        %1741 = vmatprep.subr.mxu0 0.0
        %1742 = vmatpush1.msra.mxu0 0.0
        %1743 = vmatprep.subr.mxu0 0.0
        %1744 = vmatpush1.msra.mxu0 0.0
        %1745 = vmatprep.subr.mxu0 0.0
        %1746 = vmatpush1.msra.mxu0 0.0
        %1747 = vmatprep.subr.mxu0 0.0
        %1748 = vmatpush1.msra.mxu0 0.0
        %1749 = vmatprep.subr.mxu0 0.0
        %1750 = vmatpush1.msra.mxu0 0.0
        %1751 = vmatprep.subr.mxu0 0.0
        %1752 = vmatpush1.msra.mxu0 0.0
        %1753 = vmatprep.subr.mxu0 0.0
        %1754 = vmatpush1.msra.mxu0 0.0
        %1755 = vmatprep.subr.mxu0 0.0
        %1756 = vmatpush1.msra.mxu0 0.0
        %1757 = vmatprep.subr.mxu0 0.0
        %1758 = vmatpush1.msra.mxu0 0.0
        %1759 = vmatprep.subr.mxu0 0.0
        %1760 = vmatpush1.msra.mxu0 0.0
        %1761 = vmatprep.subr.mxu0 0.0
        %1762 = vmatpush1.msra.mxu0 0.0
        %1763 = vmatprep.subr.mxu0 0.0
        %1764 = vmatpush1.msra.mxu0 0.0
        %1765 = vmatprep.subr.mxu0 0.0
        %1766 = vmatpush1.msra.mxu0 0.0
        %v1767 = vand.u32 %v1472, 4294901760
        %1768 = vmatprep.subr.mxu0 %v1767
        %v1769 = vand.u32 %v1470, 4294901760
        %1770 = vmatpush1.msra.mxu0 %v1769
        %1771 = vmatprep.subr.mxu0 0.0
        %1772 = vmatpush2.msra.mxu0 0.0
        %1773 = vmatprep.subr.mxu0 0.0
        %1774 = vmatpush2.msra.mxu0 0.0
        %1775 = vmatprep.subr.mxu0 0.0
        %1776 = vmatpush2.msra.mxu0 0.0
        %1777 = vmatprep.subr.mxu0 0.0
        %1778 = vmatpush2.msra.mxu0 0.0
        %1779 = vmatprep.subr.mxu0 0.0
        %1780 = vmatpush2.msra.mxu0 0.0
        %1781 = vmatprep.subr.mxu0 0.0
        %1782 = vmatpush2.msra.mxu0 0.0
        %1783 = vmatprep.subr.mxu0 0.0
        %1784 = vmatpush2.msra.mxu0 0.0
        %1785 = vmatprep.subr.mxu0 0.0
        %1786 = vmatpush2.msra.mxu0 0.0
        %1787 = vmatprep.subr.mxu0 0.0
        %1788 = vmatpush2.msra.mxu0 0.0
        %1789 = vmatprep.subr.mxu0 0.0
        %1790 = vmatpush2.msra.mxu0 0.0
        %1791 = vmatprep.subr.mxu0 0.0
        %1792 = vmatpush2.msra.mxu0 0.0
        %1793 = vmatprep.subr.mxu0 0.0
        %1794 = vmatpush2.msra.mxu0 0.0
        %1795 = vmatprep.subr.mxu0 0.0
        %1796 = vmatpush2.msra.mxu0 0.0
        %1797 = vmatprep.subr.mxu0 0.0
        %1798 = vmatpush2.msra.mxu0 0.0
        %1799 = vmatprep.subr.mxu0 0.0
        %1800 = vmatpush2.msra.mxu0 0.0
        %1801 = vmatprep.subr.mxu0 0.0
        %1802 = vmatpush2.msra.mxu0 0.0
        %1803 = vmatprep.mubr.f32.mxu0 0.0
        %v1804 = vand.u32 %v1465, 4294901760
        %v1805 = vsub.f32 %v1465, %v1804
        %v1806 = vand.u32 %v1805, 4294901760
        %1807 = vmatmul.mubr.f32.gmra.mxu0 %v1806
        %v1808 = vpop.f32.mrf.mxu0
        %v1809 = vadd.f32 %v1725, %v1808
        %v1810 = vpop.f32.mrf.mxu0
        %v1811 = vadd.f32 %v1727, %v1810
        %1812 = vmatprep.mubr.f32.mxu0 0.0
        %v1813 = vand.u32 %v1468, 4294901760
        %v1814 = vsub.f32 %v1468, %v1813
        %v1815 = vand.u32 %v1814, 4294901760
        %1816 = vmatmul.mubr.f32.gmra.mxu0 %v1815
        %v1817 = vpop.f32.mrf.mxu0
        %v1818 = vadd.f32 %v1733, %v1817
        %v1819 = vpop.f32.mrf.mxu0
        %v1820 = vadd.f32 %v1735, %v1819
        %1821 = vdwg.mxu0
        %1822 = vmatprep.subr.mxu0 0.0
        %1823 = vmatpush1.msra.mxu0 0.0
        %1824 = vmatprep.subr.mxu0 0.0
        %1825 = vmatpush1.msra.mxu0 0.0
        %1826 = vmatprep.subr.mxu0 0.0
        %1827 = vmatpush1.msra.mxu0 0.0
        %1828 = vmatprep.subr.mxu0 0.0
        %1829 = vmatpush1.msra.mxu0 0.0
        %1830 = vmatprep.subr.mxu0 0.0
        %1831 = vmatpush1.msra.mxu0 0.0
        %1832 = vmatprep.subr.mxu0 0.0
        %1833 = vmatpush1.msra.mxu0 0.0
        %1834 = vmatprep.subr.mxu0 0.0
        %1835 = vmatpush1.msra.mxu0 0.0
        %1836 = vmatprep.subr.mxu0 0.0
        %1837 = vmatpush1.msra.mxu0 0.0
        %1838 = vmatprep.subr.mxu0 0.0
        %1839 = vmatpush1.msra.mxu0 0.0
        %1840 = vmatprep.subr.mxu0 0.0
        %1841 = vmatpush1.msra.mxu0 0.0
        %1842 = vmatprep.subr.mxu0 0.0
        %1843 = vmatpush1.msra.mxu0 0.0
        %1844 = vmatprep.subr.mxu0 0.0
        %1845 = vmatpush1.msra.mxu0 0.0
        %1846 = vmatprep.subr.mxu0 0.0
        %1847 = vmatpush1.msra.mxu0 0.0
        %1848 = vmatprep.subr.mxu0 0.0
        %1849 = vmatpush1.msra.mxu0 0.0
        %1850 = vmatprep.subr.mxu0 0.0
        %1851 = vmatpush1.msra.mxu0 0.0
        %v1852 = vand.u32 %v1472, 4294901760
        %v1853 = vsub.f32 %v1472, %v1852
        %v1854 = vand.u32 %v1853, 4294901760
        %1855 = vmatprep.subr.mxu0 %v1854
        %v1856 = vand.u32 %v1470, 4294901760
        %v1857 = vsub.f32 %v1470, %v1856
        %v1858 = vand.u32 %v1857, 4294901760
        %1859 = vmatpush1.msra.mxu0 %v1858
        %1860 = vmatprep.subr.mxu0 0.0
        %1861 = vmatpush2.msra.mxu0 0.0
        %1862 = vmatprep.subr.mxu0 0.0
        %1863 = vmatpush2.msra.mxu0 0.0
        %1864 = vmatprep.subr.mxu0 0.0
        %1865 = vmatpush2.msra.mxu0 0.0
        %1866 = vmatprep.subr.mxu0 0.0
        %1867 = vmatpush2.msra.mxu0 0.0
        %1868 = vmatprep.subr.mxu0 0.0
        %1869 = vmatpush2.msra.mxu0 0.0
        %1870 = vmatprep.subr.mxu0 0.0
        %1871 = vmatpush2.msra.mxu0 0.0
        %1872 = vmatprep.subr.mxu0 0.0
        %1873 = vmatpush2.msra.mxu0 0.0
        %1874 = vmatprep.subr.mxu0 0.0
        %1875 = vmatpush2.msra.mxu0 0.0
        %1876 = vmatprep.subr.mxu0 0.0
        %1877 = vmatpush2.msra.mxu0 0.0
        %1878 = vmatprep.subr.mxu0 0.0
        %1879 = vmatpush2.msra.mxu0 0.0
        %1880 = vmatprep.subr.mxu0 0.0
        %1881 = vmatpush2.msra.mxu0 0.0
        %1882 = vmatprep.subr.mxu0 0.0
        %1883 = vmatpush2.msra.mxu0 0.0
        %1884 = vmatprep.subr.mxu0 0.0
        %1885 = vmatpush2.msra.mxu0 0.0
        %1886 = vmatprep.subr.mxu0 0.0
        %1887 = vmatpush2.msra.mxu0 0.0
        %1888 = vmatprep.subr.mxu0 0.0
        %1889 = vmatpush2.msra.mxu0 0.0
        %1890 = vmatprep.subr.mxu0 0.0
        %1891 = vmatpush2.msra.mxu0 0.0
        %1892 = vmatprep.mubr.f32.mxu0 0.0
        %v1893 = vand.u32 %v1465, 4294901760
        %1894 = vmatmul.mubr.f32.gmra.mxu0 %v1893
        %v1895 = vpop.f32.mrf.mxu0
        %v1896 = vadd.f32 %v1809, %v1895
        %v1897 = vpop.f32.mrf.mxu0
        %v1898 = vadd.f32 %v1811, %v1897
        %1899 = vmatprep.mubr.f32.mxu0 0.0
        %v1900 = vand.u32 %v1468, 4294901760
        %1901 = vmatmul.mubr.f32.gmra.mxu0 %v1900
        %v1902 = vpop.f32.mrf.mxu0
        %v1903 = vadd.f32 %v1818, %v1902
        %v1904 = vpop.f32.mrf.mxu0
        %v1905 = vadd.f32 %v1820, %v1904
        %1906 = vdwg.mxu0
        %1907 = vmatprep.subr.mxu0 0.0
        %1908 = vmatpush1.msra.mxu0 0.0
        %1909 = vmatprep.subr.mxu0 0.0
        %1910 = vmatpush1.msra.mxu0 0.0
        %1911 = vmatprep.subr.mxu0 0.0
        %1912 = vmatpush1.msra.mxu0 0.0
        %1913 = vmatprep.subr.mxu0 0.0
        %1914 = vmatpush1.msra.mxu0 0.0
        %1915 = vmatprep.subr.mxu0 0.0
        %1916 = vmatpush1.msra.mxu0 0.0
        %1917 = vmatprep.subr.mxu0 0.0
        %1918 = vmatpush1.msra.mxu0 0.0
        %1919 = vmatprep.subr.mxu0 0.0
        %1920 = vmatpush1.msra.mxu0 0.0
        %1921 = vmatprep.subr.mxu0 0.0
        %1922 = vmatpush1.msra.mxu0 0.0
        %1923 = vmatprep.subr.mxu0 0.0
        %1924 = vmatpush1.msra.mxu0 0.0
        %1925 = vmatprep.subr.mxu0 0.0
        %1926 = vmatpush1.msra.mxu0 0.0
        %1927 = vmatprep.subr.mxu0 0.0
        %1928 = vmatpush1.msra.mxu0 0.0
        %1929 = vmatprep.subr.mxu0 0.0
        %1930 = vmatpush1.msra.mxu0 0.0
        %1931 = vmatprep.subr.mxu0 0.0
        %1932 = vmatpush1.msra.mxu0 0.0
        %1933 = vmatprep.subr.mxu0 0.0
        %1934 = vmatpush1.msra.mxu0 0.0
        %1935 = vmatprep.subr.mxu0 0.0
        %1936 = vmatpush1.msra.mxu0 0.0
        %v1937 = vand.u32 %v1472, 4294901760
        %1938 = vmatprep.subr.mxu0 %v1937
        %v1939 = vand.u32 %v1470, 4294901760
        %1940 = vmatpush1.msra.mxu0 %v1939
        %1941 = vmatprep.subr.mxu0 0.0
        %1942 = vmatpush2.msra.mxu0 0.0
        %1943 = vmatprep.subr.mxu0 0.0
        %1944 = vmatpush2.msra.mxu0 0.0
        %1945 = vmatprep.subr.mxu0 0.0
        %1946 = vmatpush2.msra.mxu0 0.0
        %1947 = vmatprep.subr.mxu0 0.0
        %1948 = vmatpush2.msra.mxu0 0.0
        %1949 = vmatprep.subr.mxu0 0.0
        %1950 = vmatpush2.msra.mxu0 0.0
        %1951 = vmatprep.subr.mxu0 0.0
        %1952 = vmatpush2.msra.mxu0 0.0
        %1953 = vmatprep.subr.mxu0 0.0
        %1954 = vmatpush2.msra.mxu0 0.0
        %1955 = vmatprep.subr.mxu0 0.0
        %1956 = vmatpush2.msra.mxu0 0.0
        %1957 = vmatprep.subr.mxu0 0.0
        %1958 = vmatpush2.msra.mxu0 0.0
        %1959 = vmatprep.subr.mxu0 0.0
        %1960 = vmatpush2.msra.mxu0 0.0
        %1961 = vmatprep.subr.mxu0 0.0
        %1962 = vmatpush2.msra.mxu0 0.0
        %1963 = vmatprep.subr.mxu0 0.0
        %1964 = vmatpush2.msra.mxu0 0.0
        %1965 = vmatprep.subr.mxu0 0.0
        %1966 = vmatpush2.msra.mxu0 0.0
        %1967 = vmatprep.subr.mxu0 0.0
        %1968 = vmatpush2.msra.mxu0 0.0
        %1969 = vmatprep.subr.mxu0 0.0
        %1970 = vmatpush2.msra.mxu0 0.0
        %1971 = vmatprep.subr.mxu0 0.0
        %1972 = vmatpush2.msra.mxu0 0.0
        %1973 = vmatprep.mubr.f32.mxu0 0.0
        %v1974 = vand.u32 %v1465, 4294901760
        %1975 = vmatmul.mubr.f32.gmra.mxu0 %v1974
        %v1976 = vpop.f32.mrf.mxu0
        %v1977 = vadd.f32 %v1896, %v1976
        %v1978 = vpop.f32.mrf.mxu0
        %v1979 = vadd.f32 %v1898, %v1978
        %1980 = vmatprep.mubr.f32.mxu0 0.0
        %v1981 = vand.u32 %v1468, 4294901760
        %1982 = vmatmul.mubr.f32.gmra.mxu0 %v1981
        %v1983 = vpop.f32.mrf.mxu0
        %v1984 = vadd.f32 %v1903, %v1983
        %v1985 = vpop.f32.mrf.mxu0
        %v1986 = vadd.f32 %v1905, %v1985
        %1987 = vdwg.mxu0
        %v1988 = vadd.f32 %v1977, %v271
        %v1989 = vadd.f32 %v1979, %v272
        %v1990 = vadd.f32 %v1984, %v273
        %v1991 = vadd.f32 %v1986, %v274
        %v1992 = vmax.f32 %v1988, 0.0
        %v1993 = vmax.f32 %v1989, 0.0
        %v1994 = vmax.f32 %v1990, 0.0
        %v1995 = vmax.f32 %v1991, 0.0
        %1996 = vst [vmem:[%s269] sm:$0xff] %v1992
        %1997 = vst [vmem:[%s269 + $0x8] sm:$0xff] %v1993
        %1998 = vst [vmem:[%s269 + $0x10] sm:$0xff] %v1994
        %1999 = vst [vmem:[%s269 + $0x18] sm:$0xff] %v1995
        %s2000 = sand.u32 %s162, 1
        %s2001 = scalar_lea.sflag [#allocation4], %s2000
        %s2002 = sand.u32 %s162, 1
        %s2003 = smul.addr %s2002, 32
        %s2004 = scalar_lea.vmem [#allocation5], %s2003
        // Predicated region
        $region49: #{tpu_custom_call.1} parent=43 // pred_check
          %p2005 = pneg %p172
        $region50: #{tpu_custom_call.1} parent=43 // pred_check_branch
          %2007 = sbr.rel (%p2005) target = $region52
        $region51: #{tpu_custom_call.1} parent=43 // pred_region
          %s2009 = ssub.s32 512, 512
          %2010 = vsyncadd %s2001, %s2009
          %s2011 = smul.addr %s23, 4
          %s2012 = smul.addr %s2011, 128
          %s2013 = scalar_lea.hbm %s6, %s2012
          %s2014 = sshll.u32 %s2004, 4
          %s2015 = int_to_ptr.vmem [resolvable:$true] %s2014
          %2020 = dma.vmem_to_hbm [thread:$0]  %s2015, 512, %s2013, %s2001, 256, 256, 16
        $region52: #{tpu_custom_call.1} parent=43 // pred_fallthru
          _
      $region44: #{tpu_custom_call.1} parent=5 // pred_fallthru
        _
      %p2021 = scmp.le.s32.totalorder 2, %s18
      // Predicated region
      $region53: #{tpu_custom_call.1} parent=5 // pred_check
        %p2022 = pneg %p2021
      $region54: #{tpu_custom_call.1} parent=5 // pred_check_branch
        %2024 = sbr.rel (%p2022) target = $region56
      $region55: #{tpu_custom_call.1} parent=5 // pred_region
        %s2025 = ssub.s32 %s18, 2
        // Predicated region
        $region57: #{tpu_custom_call.1} parent=55 // pred_check
          %p2026 = pneg %p178
        $region58: #{tpu_custom_call.1} parent=55 // pred_check_branch
          %2028 = sbr.rel (%p2026) target = $region60
        $region59: #{tpu_custom_call.1} parent=55 // pred_region
          %s2029 = sand.u32 %s163, 1
          %s2030 = scalar_lea.sflag [#allocation4], %s2029
          %s2031 = sand.u32 %s163, 1
          %s2032 = smul.addr %s2031, 32
          %s2033 = scalar_lea.vmem [#allocation5], %s2032
          %2034 = dma.done %s2030, 512
        $region60: #{tpu_custom_call.1} parent=55 // pred_fallthru
          _
      $region56: #{tpu_custom_call.1} parent=5 // pred_fallthru
        _
    $region6: #{tpu_custom_call.1} parent=1 // loop_footer
      %s22 = sadd.s32 1, %s18
    $region7: #{tpu_custom_call.1} parent=1 // loop_footer_branch
      %17 = sbr.rel target = $region3
    $region8: #{tpu_custom_call.1} parent=1 // loop_exit
      _
    %2035 = vsyncpa [#allocation3], 1
    %s2036 = scalar_lea.sflag [#allocation3], 1
    %2037 = vsyncpa %s2036, 1
    %2038 = vsyncpa [#allocation4], 1
    %s2039 = scalar_lea.sflag [#allocation4], 1
    %2040 = vsyncpa %s2039, 1

</llo_original>
